<compile_context>
chip_gen: v6e
topology: v6e:2x2x1
jax: 0.10.0
libtpu: 0.0.40
codegen_flags: <defaults>
</compile_context>

<pallas_src>
import math
from functools import partial

import numpy as np

import jax
import jax.numpy as jnp
from jax.experimental import pallas as pl
from jax.experimental.pallas import tpu as pltpu

# ---------------- model config (small, consistent with the module) ----------
B = 2            # batch
S = 16           # sequence length
D = 128          # d_model
H = 16           # heads (module default h=16)
DK = D // H      # d_k = 8
DF = D // 2      # FFN hidden = d_model // 2
BS = B * S       # fused batch*seq rows = 32
EPS = 1e-6


def _layernorm(z, g, b):
    mu = jnp.mean(z, axis=-1, keepdims=True)
    var = jnp.mean((z - mu) ** 2, axis=-1, keepdims=True)
    return (z - mu) * jax.lax.rsqrt(var + EPS) * g + b


def _make_kernel(use_batch_mask):
    """Kernel factory; `use_batch_mask` is a static Python flag (it is False
    when each grid step holds exactly one batch element)."""

    def encoder_kernel(x_ref, wqkv_ref, wmat_ref, vec_ref,
                       sel_ref, hm_ref, bm_ref, gs_ref, gst_ref, o_ref):
        f32 = jnp.float32
        x = x_ref[...]                  # (R, D)
        wmat = wmat_ref[...]            # (D, 3D) = [Wo | W1p | W2p]
        vecs = vec_ref[...]             # (8, 3D)

        bqkv = vecs[0:1, :]             # (1, 3D)
        bo = vecs[1:2, 0:D]
        b1 = vecs[2:3, 0:D]
        b2 = vecs[3:4, 0:D]
        g1 = vecs[4:5, 0:D]
        be1 = vecs[5:6, 0:D]
        g2 = vecs[6:7, 0:D]
        be2 = vecs[7:8, 0:D]

        # ---- fused QKV projection (q pre-scaled by 1/sqrt(d_k) host-side) --
        qkv = jnp.dot(x, wqkv_ref[...], preferred_element_type=f32) + bqkv
        q = qkv[:, 0:D]                 # (R, D)

        # ---- fused K/V expansion: one (E,R) x (R,2D) matmul, then zero the
        #      non-head lanes with the host-precomputed head mask. -----------
        hm = hm_ref[...]                # (E, D)
        kv_exp = jnp.dot(sel_ref[...], qkv[:, D:3 * D],
                         preferred_element_type=f32)          # (E, 2D)
        k_exp = kv_exp[:, 0:D] * hm     # (E, D)
        v_exp = kv_exp[:, D:2 * D] * hm

        # scores[r, e] = <q_r, k_src(e)> restricted to head(e)'s lanes.
        scores = jax.lax.dot_general(q, k_exp, (((1,), (1,)), ((), ())),
                                     preferred_element_type=f32)  # (R, E)

        # ---- grouped softmax: one softmax per run of S columns -------------
        # Row max >= every group max, so exp never overflows.
        # TODO(synk): per-(batch,head) group max for adversarial score
        #             spreads (>~80); cannot occur for this module's scale.
        m = jnp.max(scores, axis=-1, keepdims=True)
        e_exp = jnp.exp(scores - m)
        if use_batch_mask:
            # multiplicative cross-batch mask (no -1e9 / underflow games)
            e_exp = e_exp * bm_ref[...]

        denom = jnp.dot(e_exp, gs_ref[...], preferred_element_type=f32)  # (R,G)
        denom = jnp.maximum(denom, 1e-30)        # fully-masked groups sum to 0
        r0 = pl.reciprocal(denom, approx=True)   # EUP approx ...
        recip = r0 * (2.0 - denom * r0)          # ... + one Newton step
        p = e_exp * jnp.dot(recip, gst_ref[...], preferred_element_type=f32)

        ctx = jnp.dot(p, v_exp, preferred_element_type=f32)    # (R, D)

        # ---- output projection + residual + LayerNorm 1 --------------------
        attn = jnp.dot(ctx, wmat[:, 0:D], preferred_element_type=f32) + bo
        out1 = _layernorm(attn + x, g1, be1)

        # ---- position-wise FFN (W1/b1/W2 zero-padded to 128 lanes) ---------
        hid = jnp.maximum(
            jnp.dot(out1, wmat[:, D:2 * D], preferred_element_type=f32) + b1,
            0.0)
        ffn = jnp.dot(hid, wmat[:, 2 * D:3 * D],
                      preferred_element_type=f32) + b2
        out2 = _layernorm(out1 + ffn, g2, be2)

        o_ref[...] = out2.astype(o_ref.dtype)

    return encoder_kernel


def _make_masks(bpb):
    """Constant 0/1 selection / mask matrices for `bpb` batch elements/block.
    expanded row e = (b_local, h, j); source row = b_local*S + j."""
    R, E, G = bpb * S, bpb * H * S, bpb * H
    e = np.arange(E)
    src = (e // (H * S)) * S + (e % S)                      # source row of e
    head = (e // S) % H                                     # head of e
    sel = (src[:, None] == np.arange(R)[None, :])           # (E, R)
    hm = (head[:, None] == (np.arange(D)[None, :] // DK))   # (E, D)
    bm = ((np.arange(R)[:, None] // S) == (e[None, :] // (H * S)))  # (R, E)
    gs = ((e[:, None] // S) == np.arange(G)[None, :])       # (E, G)

    def to(a):
        return jnp.asarray(np.ascontiguousarray(a).astype(np.float32))

    return to(sel), to(hm), to(bm), to(gs), to(gs.T)


def _default_batches_per_block():
    """One batch per grid step on 2-TensorCore chips (v7x/v4/v5p) so the
    'parallel' grid axis shards across cores; whole batch in one step on
    single-core chips (v5e/v6e)."""
    try:
        kind = jax.devices()[0].device_kind.lower()
    except Exception:
        return B
    if any(tag in kind for tag in ("v7", "v4", "v5p")):
        return 1
    return B


def encoder_layer(x, params, batches_per_block=None):
    """x: (B, S, D) float32.  params: the 16 raw module parameters."""
    wq, bq, wk, bk, wv, bv, wo, bo, w1, b1, w2, b2, g1, be1, g2, be2 = params
    Bn, Sn, Dn = x.shape
    assert (Bn, Sn, Dn) == (B, S, D)

    bpb = (batches_per_block if batches_per_block is not None
           else _default_batches_per_block())
    assert B % bpb == 0
    nb = B // bpb                            # grid steps
    R, E, G = bpb * S, bpb * H * S, bpb * H  # rows / expanded cols / groups

    # ---- host-side parameter packing into lane-dense slabs -----------------
    inv = 1.0 / math.sqrt(DK)
    wqkv = jnp.concatenate([wq * inv, wk, wv], axis=1)            # (D, 3D)
    bqkv = jnp.concatenate([bq * inv, bk, bv], axis=1)            # (1, 3D)

    w1p = jnp.pad(w1, ((0, 0), (0, D - DF)))                      # (D, D)
    w2p = jnp.pad(w2, ((0, D - DF), (0, 0)))                      # (D, D)
    wmat = jnp.concatenate([wo, w1p, w2p], axis=1)                # (D, 3D)

    b1p = jnp.pad(b1, ((0, 0), (0, D - DF)))                      # (1, D)

    def pad3(v):                                                  # (1,D)->(1,3D)
        return jnp.pad(v, ((0, 0), (0, 2 * D)))

    vecs = jnp.concatenate(
        [bqkv] + [pad3(v) for v in (bo, b1p, b2, g1, be1, g2, be2)],
        axis=0)                                                   # (8, 3D)

    sel, hm, bm, gs, gst = _make_masks(bpb)
    xf = x.reshape(BS, D)

    # advisory cost estimate so XLA schedules surrounding packing around the
    # latency-bound custom call.
    flops = (2 * BS * D * 3 * D + 2 * BS * D * D * 3
             + nb * 2 * R * E * (4 * D + 2 * G))
    nbytes = 4 * (xf.size + wqkv.size + wmat.size + vecs.size + sel.size
                  + hm.size + bm.size + gs.size + gst.size + BS * D)
    cost = pl.CostEstimate(flops=int(flops),
                           transcendentals=int(nb * R * (E + G) + 2 * BS),
                           bytes_accessed=int(nbytes))

    out = pl.pallas_call(
        _make_kernel(use_batch_mask=(bpb > 1)),
        out_shape=jax.ShapeDtypeStruct((BS, D), jnp.float32),
        grid_spec=pltpu.PrefetchScalarGridSpec(
            num_scalar_prefetch=0,
            grid=(nb,),
            in_specs=[
                pl.BlockSpec((R, D), lambda i: (i, 0)),        # x block
                pl.BlockSpec((D, 3 * D), lambda i: (0, 0)),    # [Wq|Wk|Wv]
                pl.BlockSpec((D, 3 * D), lambda i: (0, 0)),    # [Wo|W1|W2]
                pl.BlockSpec((8, 3 * D), lambda i: (0, 0)),    # biases / LN
                pl.BlockSpec((E, R), lambda i: (0, 0)),        # sel
                pl.BlockSpec((E, D), lambda i: (0, 0)),        # head mask
                pl.BlockSpec((R, E), lambda i: (0, 0)),        # batch mask
                pl.BlockSpec((E, G), lambda i: (0, 0)),        # group sum
                pl.BlockSpec((G, E), lambda i: (0, 0)),        # group bcast
            ],
            out_specs=pl.BlockSpec((R, D), lambda i: (i, 0)),
        ),
        compiler_params=pltpu.CompilerParams(
            dimension_semantics=("parallel",)),
        cost_estimate=cost,
    )(xf, wqkv, wmat, vecs, sel, hm, bm, gs, gst)

    return out.reshape(Bn, Sn, Dn)


# ---------------- pure-JAX reference (mirrors the PyTorch forward) ----------
def ref_forward(x, p):
    wq, bq, wk, bk, wv, bv, wo, bo, w1, b1, w2, b2, g1, be1, g2, be2 = p

    def lin(z, w, b):
        return z @ w + b

    q = lin(x, wq, bq)
    k = lin(x, wk, bk)
    v = lin(x, wv, bv)

    def split(z):  # (B,S,D) -> (B,H,S,DK)
        return z.reshape(B, S, H, DK).transpose(0, 2, 1, 3)

    qh, kh, vh = split(q), split(k), split(v)
    sc = jnp.einsum('bhqd,bhkd->bhqk', qh, kh) / math.sqrt(DK)
    pa = jax.nn.softmax(sc, axis=-1)
    at = jnp.einsum('bhqk,bhkd->bhqd', pa, vh)
    at = at.transpose(0, 2, 1, 3).reshape(B, S, D)
    attn_out = lin(at, wo, bo)

    def ln(z, g, b):
        mu = jnp.mean(z, axis=-1, keepdims=True)
        var = jnp.mean((z - mu) ** 2, axis=-1, keepdims=True)
        return (z - mu) * jax.lax.rsqrt(var + EPS) * g + b

    out1 = ln(attn_out + x, g1, be1)
    ffn = lin(jnp.maximum(lin(out1, w1, b1), 0.0), w2, b2)
    return ln(out1 + ffn, g2, be2)


def make_params(key):
    """Deterministic init. Linear weights stored (in, out) so y = x @ W + b."""
    ks = jax.random.split(key, 12)

    def w(k, fin, fout):
        bound = 1.0 / math.sqrt(fin)
        return jax.random.uniform(k, (fin, fout), jnp.float32, -bound, bound)

    def bias(k, fin, fout):
        bound = 1.0 / math.sqrt(fin)
        return jax.random.uniform(k, (1, fout), jnp.float32, -bound, bound)

    wq, bq = w(ks[0], D, D), bias(ks[1], D, D)
    wk, bk = w(ks[2], D, D), bias(ks[3], D, D)
    wv, bv = w(ks[4], D, D), bias(ks[5], D, D)
    wo, bo = w(ks[6], D, D), bias(ks[7], D, D)
    w1, b1 = w(ks[8], D, DF), bias(ks[9], D, DF)
    w2, b2 = w(ks[10], DF, D), bias(ks[11], DF, D)
    g1, be1 = jnp.ones((1, D), jnp.float32), jnp.zeros((1, D), jnp.float32)
    g2, be2 = jnp.ones((1, D), jnp.float32), jnp.zeros((1, D), jnp.float32)
    return [wq, bq, wk, bk, wv, bv, wo, bo, w1, b1, w2, b2, g1, be1, g2, be2]


if __name__ == "__main__":
    key = jax.random.PRNGKey(0)
    kx, kp = jax.random.split(key)
    x = jax.random.normal(kx, (B, S, D), jnp.float32)
    params = make_params(kp)

    ref = ref_forward(x, params)

    enc = jax.jit(encoder_layer, static_argnames=("batches_per_block",))

    # Exercise both grid layouts: whole-batch single step (v5e/v6e) and
    # one-batch-per-step parallel grid (v7x / other 2-TensorCore chips).
    for bpb in (B, 1):
        out = jax.block_until_ready(enc(x, params, batches_per_block=bpb))
        assert out.shape == (B, S, D)
        err = jnp.max(jnp.abs(out - ref))
        assert jnp.allclose(out, ref, atol=1e-3, rtol=1e-3), (
            f"bpb={bpb}: max abs err {err}")

    # Default (auto-detected from the device) path.
    out = jax.block_until_ready(enc(x, params))
    assert jnp.allclose(out, ref, atol=1e-3, rtol=1e-3)
    print("KERNEL_OK")
</pallas_src>

<mosaic_0001>
module attributes {stable_mosaic.version = 11 : i64} {
  func.func @encoder_kernel(%arg0: i32, %arg1: memref<32x128xf32, #tpu.memory_space<vmem>>, %arg2: memref<128x384xf32, #tpu.memory_space<vmem>>, %arg3: memref<128x384xf32, #tpu.memory_space<vmem>>, %arg4: memref<8x384xf32, #tpu.memory_space<vmem>>, %arg5: memref<512x32xf32, #tpu.memory_space<vmem>>, %arg6: memref<512x128xf32, #tpu.memory_space<vmem>>, %arg7: memref<32x512xf32, #tpu.memory_space<vmem>>, %arg8: memref<512x32xf32, #tpu.memory_space<vmem>>, %arg9: memref<32x512xf32, #tpu.memory_space<vmem>>, %arg10: memref<32x128xf32, #tpu.memory_space<vmem>>) attributes {dimension_semantics = [#tpu.dimension_semantics<parallel>], iteration_bounds = array<i64: 1>, scalar_prefetch = 0 : i64, scratch_operands = 0 : i64, tpu.core_type = #tpu.core_type<tc>, window_params = [{transform_indices = @transform_0, window_bounds = array<i64: 32, 128>}, {pipeline_mode = #tpu.pipeline_mode<synchronous>, transform_indices = @transform_1, window_bounds = array<i64: 128, 384>}, {pipeline_mode = #tpu.pipeline_mode<synchronous>, transform_indices = @transform_2, window_bounds = array<i64: 128, 384>}, {pipeline_mode = #tpu.pipeline_mode<synchronous>, transform_indices = @transform_3, window_bounds = array<i64: 8, 384>}, {pipeline_mode = #tpu.pipeline_mode<synchronous>, transform_indices = @transform_4, window_bounds = array<i64: 512, 32>}, {pipeline_mode = #tpu.pipeline_mode<synchronous>, transform_indices = @transform_5, window_bounds = array<i64: 512, 128>}, {pipeline_mode = #tpu.pipeline_mode<synchronous>, transform_indices = @transform_6, window_bounds = array<i64: 32, 512>}, {pipeline_mode = #tpu.pipeline_mode<synchronous>, transform_indices = @transform_7, window_bounds = array<i64: 512, 32>}, {pipeline_mode = #tpu.pipeline_mode<synchronous>, transform_indices = @transform_8, window_bounds = array<i64: 32, 512>}, {transform_indices = @transform_9, window_bounds = array<i64: 32, 128>}]} {
    %c0 = arith.constant 0 : index
    %c0_0 = arith.constant 0 : index
    %0 = vector.load %arg1[%c0, %c0_0] : memref<32x128xf32, #tpu.memory_space<vmem>>, vector<32x128xf32>
    %c0_1 = arith.constant 0 : index
    %c0_2 = arith.constant 0 : index
    %1 = vector.load %arg3[%c0_1, %c0_2] : memref<128x384xf32, #tpu.memory_space<vmem>>, vector<128x384xf32>
    %c0_3 = arith.constant 0 : index
    %c0_4 = arith.constant 0 : index
    %2 = vector.load %arg4[%c0_3, %c0_4] : memref<8x384xf32, #tpu.memory_space<vmem>>, vector<8x384xf32>
    %3 = vector.extract_strided_slice %2 {offsets = [0, 0], sizes = [1, 384], strides = [1, 1]} : vector<8x384xf32> to vector<1x384xf32>
    %4 = vector.extract_strided_slice %2 {offsets = [1, 0], sizes = [1, 128], strides = [1, 1]} : vector<8x384xf32> to vector<1x128xf32>
    %5 = vector.extract_strided_slice %2 {offsets = [2, 0], sizes = [1, 128], strides = [1, 1]} : vector<8x384xf32> to vector<1x128xf32>
    %6 = vector.extract_strided_slice %2 {offsets = [3, 0], sizes = [1, 128], strides = [1, 1]} : vector<8x384xf32> to vector<1x128xf32>
    %7 = vector.extract_strided_slice %2 {offsets = [4, 0], sizes = [1, 128], strides = [1, 1]} : vector<8x384xf32> to vector<1x128xf32>
    %8 = vector.extract_strided_slice %2 {offsets = [5, 0], sizes = [1, 128], strides = [1, 1]} : vector<8x384xf32> to vector<1x128xf32>
    %9 = vector.extract_strided_slice %2 {offsets = [6, 0], sizes = [1, 128], strides = [1, 1]} : vector<8x384xf32> to vector<1x128xf32>
    %10 = vector.extract_strided_slice %2 {offsets = [7, 0], sizes = [1, 128], strides = [1, 1]} : vector<8x384xf32> to vector<1x128xf32>
    %c0_5 = arith.constant 0 : index
    %c0_6 = arith.constant 0 : index
    %11 = vector.load %arg2[%c0_5, %c0_6] : memref<128x384xf32, #tpu.memory_space<vmem>>, vector<128x384xf32>
    %cst = arith.constant dense<0.000000e+00> : vector<32x384xf32>
    %12 = tpu.matmul %0, %11, %cst {dimension_numbers = #tpu.dot_dimension_numbers<[1], [0], [0], [1], [0, 0, 1, 1], [], []>} : vector<32x128xf32>, vector<128x384xf32>, vector<32x384xf32> -> vector<32x384xf32>
    %13 = vector.broadcast %3 : vector<1x384xf32> to vector<32x384xf32>
    %14 = arith.addf %12, %13 : vector<32x384xf32>
    %15 = vector.extract_strided_slice %14 {offsets = [0, 0], sizes = [32, 128], strides = [1, 1]} : vector<32x384xf32> to vector<32x128xf32>
    %c0_7 = arith.constant 0 : index
    %c0_8 = arith.constant 0 : index
    %16 = vector.load %arg6[%c0_7, %c0_8] : memref<512x128xf32, #tpu.memory_space<vmem>>, vector<512x128xf32>
    %c0_9 = arith.constant 0 : index
    %c0_10 = arith.constant 0 : index
    %17 = vector.load %arg5[%c0_9, %c0_10] : memref<512x32xf32, #tpu.memory_space<vmem>>, vector<512x32xf32>
    %18 = vector.extract_strided_slice %14 {offsets = [0, 128], sizes = [32, 256], strides = [1, 1]} : vector<32x384xf32> to vector<32x256xf32>
    %cst_11 = arith.constant dense<0.000000e+00> : vector<512x256xf32>
    %19 = tpu.matmul %17, %18, %cst_11 {dimension_numbers = #tpu.dot_dimension_numbers<[1], [0], [0], [1], [0, 0, 1, 1], [], []>} : vector<512x32xf32>, vector<32x256xf32>, vector<512x256xf32> -> vector<512x256xf32>
    %20 = vector.extract_strided_slice %19 {offsets = [0, 0], sizes = [512, 128], strides = [1, 1]} : vector<512x256xf32> to vector<512x128xf32>
    %21 = arith.mulf %20, %16 : vector<512x128xf32>
    %22 = vector.extract_strided_slice %19 {offsets = [0, 128], sizes = [512, 128], strides = [1, 1]} : vector<512x256xf32> to vector<512x128xf32>
    %23 = arith.mulf %22, %16 : vector<512x128xf32>
    %cst_12 = arith.constant dense<0.000000e+00> : vector<32x512xf32>
    %24 = tpu.matmul %15, %21, %cst_12 {dimension_numbers = #tpu.dot_dimension_numbers<[1], [1], [0], [0], [0, 0, 1, 0], [], []>} : vector<32x128xf32>, vector<512x128xf32>, vector<32x512xf32> -> vector<32x512xf32>
    %cst_13 = arith.constant dense<0xFF800000> : vector<32xf32>
    %25 = vector.multi_reduction <maximumf>, %24, %cst_13 [1] : vector<32x512xf32> to vector<32xf32>
    %26 = vector.shape_cast %25 : vector<32xf32> to vector<32x1xf32>
    %27 = vector.broadcast %26 : vector<32x1xf32> to vector<32x512xf32>
    %28 = arith.subf %24, %27 : vector<32x512xf32>
    %29 = math.exp %28 : vector<32x512xf32>
    %c0_14 = arith.constant 0 : index
    %c0_15 = arith.constant 0 : index
    %30 = vector.load %arg7[%c0_14, %c0_15] : memref<32x512xf32, #tpu.memory_space<vmem>>, vector<32x512xf32>
    %31 = arith.mulf %29, %30 : vector<32x512xf32>
    %c0_16 = arith.constant 0 : index
    %c0_17 = arith.constant 0 : index
    %32 = vector.load %arg8[%c0_16, %c0_17] : memref<512x32xf32, #tpu.memory_space<vmem>>, vector<512x32xf32>
    %cst_18 = arith.constant dense<0.000000e+00> : vector<32x32xf32>
    %33 = tpu.matmul %31, %32, %cst_18 {dimension_numbers = #tpu.dot_dimension_numbers<[1], [0], [0], [1], [0, 0, 1, 1], [], []>} : vector<32x512xf32>, vector<512x32xf32>, vector<32x32xf32> -> vector<32x32xf32>
    %cst_19 = arith.constant 1.000000e-30 : f32
    %34 = vector.broadcast %cst_19 : f32 to vector<32x32xf32>
    %35 = arith.maximumf %33, %34 : vector<32x32xf32>
    %36 = tpu.reciprocal %35 {approx = true} : vector<32x32xf32> -> vector<32x32xf32>
    %37 = arith.mulf %35, %36 : vector<32x32xf32>
    %cst_20 = arith.constant 2.000000e+00 : f32
    %38 = vector.broadcast %cst_20 : f32 to vector<32x32xf32>
    %39 = arith.subf %38, %37 : vector<32x32xf32>
    %40 = arith.mulf %36, %39 : vector<32x32xf32>
    %c0_21 = arith.constant 0 : index
    %c0_22 = arith.constant 0 : index
    %41 = vector.load %arg9[%c0_21, %c0_22] : memref<32x512xf32, #tpu.memory_space<vmem>>, vector<32x512xf32>
    %cst_23 = arith.constant dense<0.000000e+00> : vector<32x512xf32>
    %42 = tpu.matmul %40, %41, %cst_23 {dimension_numbers = #tpu.dot_dimension_numbers<[1], [0], [0], [1], [0, 0, 1, 1], [], []>} : vector<32x32xf32>, vector<32x512xf32>, vector<32x512xf32> -> vector<32x512xf32>
    %43 = arith.mulf %31, %42 : vector<32x512xf32>
    %cst_24 = arith.constant dense<0.000000e+00> : vector<32x128xf32>
    %44 = tpu.matmul %43, %23, %cst_24 {dimension_numbers = #tpu.dot_dimension_numbers<[1], [0], [0], [1], [0, 0, 1, 1], [], []>} : vector<32x512xf32>, vector<512x128xf32>, vector<32x128xf32> -> vector<32x128xf32>
    %45 = vector.extract_strided_slice %1 {offsets = [0, 0], sizes = [128, 128], strides = [1, 1]} : vector<128x384xf32> to vector<128x128xf32>
    %cst_25 = arith.constant dense<0.000000e+00> : vector<32x128xf32>
    %46 = tpu.matmul %44, %45, %cst_25 {dimension_numbers = #tpu.dot_dimension_numbers<[1], [0], [0], [1], [0, 0, 1, 1], [], []>} : vector<32x128xf32>, vector<128x128xf32>, vector<32x128xf32> -> vector<32x128xf32>
    %47 = vector.broadcast %4 : vector<1x128xf32> to vector<32x128xf32>
    %48 = arith.addf %46, %47 : vector<32x128xf32>
    %49 = arith.addf %48, %0 : vector<32x128xf32>
    %cst_26 = arith.constant dense<0.000000e+00> : vector<32xf32>
    %50 = vector.multi_reduction <add>, %49, %cst_26 [1] : vector<32x128xf32> to vector<32xf32>
    %51 = vector.shape_cast %50 : vector<32xf32> to vector<32x1xf32>
    %cst_27 = arith.constant 1.280000e+02 : f32
    %52 = vector.broadcast %cst_27 : f32 to vector<32x1xf32>
    %53 = arith.divf %51, %52 : vector<32x1xf32>
    %54 = vector.broadcast %53 : vector<32x1xf32> to vector<32x128xf32>
    %55 = arith.subf %49, %54 : vector<32x128xf32>
    %56 = arith.mulf %55, %55 : vector<32x128xf32>
    %cst_28 = arith.constant dense<0.000000e+00> : vector<32xf32>
    %57 = vector.multi_reduction <add>, %56, %cst_28 [1] : vector<32x128xf32> to vector<32xf32>
    %58 = vector.shape_cast %57 : vector<32xf32> to vector<32x1xf32>
    %cst_29 = arith.constant 1.280000e+02 : f32
    %59 = vector.broadcast %cst_29 : f32 to vector<32x1xf32>
    %60 = arith.divf %58, %59 : vector<32x1xf32>
    %61 = vector.broadcast %53 : vector<32x1xf32> to vector<32x128xf32>
    %62 = arith.subf %49, %61 : vector<32x128xf32>
    %cst_30 = arith.constant 9.99999997E-7 : f32
    %63 = vector.broadcast %cst_30 : f32 to vector<32x1xf32>
    %64 = arith.addf %60, %63 : vector<32x1xf32>
    %65 = math.rsqrt %64 : vector<32x1xf32>
    %66 = vector.broadcast %65 : vector<32x1xf32> to vector<32x128xf32>
    %67 = arith.mulf %62, %66 : vector<32x128xf32>
    %68 = vector.broadcast %7 : vector<1x128xf32> to vector<32x128xf32>
    %69 = arith.mulf %67, %68 : vector<32x128xf32>
    %70 = vector.broadcast %8 : vector<1x128xf32> to vector<32x128xf32>
    %71 = arith.addf %69, %70 : vector<32x128xf32>
    %72 = vector.extract_strided_slice %1 {offsets = [0, 128], sizes = [128, 128], strides = [1, 1]} : vector<128x384xf32> to vector<128x128xf32>
    %cst_31 = arith.constant dense<0.000000e+00> : vector<32x128xf32>
    %73 = tpu.matmul %71, %72, %cst_31 {dimension_numbers = #tpu.dot_dimension_numbers<[1], [0], [0], [1], [0, 0, 1, 1], [], []>} : vector<32x128xf32>, vector<128x128xf32>, vector<32x128xf32> -> vector<32x128xf32>
    %74 = vector.broadcast %5 : vector<1x128xf32> to vector<32x128xf32>
    %75 = arith.addf %73, %74 : vector<32x128xf32>
    %cst_32 = arith.constant 0.000000e+00 : f32
    %76 = vector.broadcast %cst_32 : f32 to vector<32x128xf32>
    %77 = arith.maximumf %75, %76 : vector<32x128xf32>
    %78 = vector.extract_strided_slice %1 {offsets = [0, 256], sizes = [128, 128], strides = [1, 1]} : vector<128x384xf32> to vector<128x128xf32>
    %cst_33 = arith.constant dense<0.000000e+00> : vector<32x128xf32>
    %79 = tpu.matmul %77, %78, %cst_33 {dimension_numbers = #tpu.dot_dimension_numbers<[1], [0], [0], [1], [0, 0, 1, 1], [], []>} : vector<32x128xf32>, vector<128x128xf32>, vector<32x128xf32> -> vector<32x128xf32>
    %80 = vector.broadcast %6 : vector<1x128xf32> to vector<32x128xf32>
    %81 = arith.addf %79, %80 : vector<32x128xf32>
    %82 = arith.addf %71, %81 : vector<32x128xf32>
    %cst_34 = arith.constant dense<0.000000e+00> : vector<32xf32>
    %83 = vector.multi_reduction <add>, %82, %cst_34 [1] : vector<32x128xf32> to vector<32xf32>
    %84 = vector.shape_cast %83 : vector<32xf32> to vector<32x1xf32>
    %cst_35 = arith.constant 1.280000e+02 : f32
    %85 = vector.broadcast %cst_35 : f32 to vector<32x1xf32>
    %86 = arith.divf %84, %85 : vector<32x1xf32>
    %87 = vector.broadcast %86 : vector<32x1xf32> to vector<32x128xf32>
    %88 = arith.subf %82, %87 : vector<32x128xf32>
    %89 = arith.mulf %88, %88 : vector<32x128xf32>
    %cst_36 = arith.constant dense<0.000000e+00> : vector<32xf32>
    %90 = vector.multi_reduction <add>, %89, %cst_36 [1] : vector<32x128xf32> to vector<32xf32>
    %91 = vector.shape_cast %90 : vector<32xf32> to vector<32x1xf32>
    %cst_37 = arith.constant 1.280000e+02 : f32
    %92 = vector.broadcast %cst_37 : f32 to vector<32x1xf32>
    %93 = arith.divf %91, %92 : vector<32x1xf32>
    %94 = vector.broadcast %86 : vector<32x1xf32> to vector<32x128xf32>
    %95 = arith.subf %82, %94 : vector<32x128xf32>
    %cst_38 = arith.constant 9.99999997E-7 : f32
    %96 = vector.broadcast %cst_38 : f32 to vector<32x1xf32>
    %97 = arith.addf %93, %96 : vector<32x1xf32>
    %98 = math.rsqrt %97 : vector<32x1xf32>
    %99 = vector.broadcast %98 : vector<32x1xf32> to vector<32x128xf32>
    %100 = arith.mulf %95, %99 : vector<32x128xf32>
    %101 = vector.broadcast %9 : vector<1x128xf32> to vector<32x128xf32>
    %102 = arith.mulf %100, %101 : vector<32x128xf32>
    %103 = vector.broadcast %10 : vector<1x128xf32> to vector<32x128xf32>
    %104 = arith.addf %102, %103 : vector<32x128xf32>
    %c0_39 = arith.constant 0 : index
    %c0_40 = arith.constant 0 : index
    %105 = vector.load %arg10[%c0_39, %c0_40] : memref<32x128xf32, #tpu.memory_space<vmem>>, vector<32x128xf32>
    tpu.vector_store %arg10[%c0_39, %c0_40], %104 {strides = array<i32>} : memref<32x128xf32, #tpu.memory_space<vmem>>, vector<32x128xf32>,
    return
  }
  func.func @transform_0(%arg0: i32) -> (i32, i32) {
    %c0_i32 = arith.constant 0 : i32
    %c0_i32_0 = arith.constant 0 : i32
    return %arg0, %c0_i32 : i32, i32
  }
  func.func @transform_1(%arg0: i32) -> (i32, i32) {
    %c0_i32 = arith.constant 0 : i32
    %c0_i32_0 = arith.constant 0 : i32
    %c0_i32_1 = arith.constant 0 : i32
    return %c0_i32, %c0_i32_0 : i32, i32
  }
  func.func @transform_2(%arg0: i32) -> (i32, i32) {
    %c0_i32 = arith.constant 0 : i32
    %c0_i32_0 = arith.constant 0 : i32
    %c0_i32_1 = arith.constant 0 : i32
    return %c0_i32, %c0_i32_0 : i32, i32
  }
  func.func @transform_3(%arg0: i32) -> (i32, i32) {
    %c0_i32 = arith.constant 0 : i32
    %c0_i32_0 = arith.constant 0 : i32
    %c0_i32_1 = arith.constant 0 : i32
    return %c0_i32, %c0_i32_0 : i32, i32
  }
  func.func @transform_4(%arg0: i32) -> (i32, i32) {
    %c0_i32 = arith.constant 0 : i32
    %c0_i32_0 = arith.constant 0 : i32
    %c0_i32_1 = arith.constant 0 : i32
    return %c0_i32, %c0_i32_0 : i32, i32
  }
  func.func @transform_5(%arg0: i32) -> (i32, i32) {
    %c0_i32 = arith.constant 0 : i32
    %c0_i32_0 = arith.constant 0 : i32
    %c0_i32_1 = arith.constant 0 : i32
    return %c0_i32, %c0_i32_0 : i32, i32
  }
  func.func @transform_6(%arg0: i32) -> (i32, i32) {
    %c0_i32 = arith.constant 0 : i32
    %c0_i32_0 = arith.constant 0 : i32
    %c0_i32_1 = arith.constant 0 : i32
    return %c0_i32, %c0_i32_0 : i32, i32
  }
  func.func @transform_7(%arg0: i32) -> (i32, i32) {
    %c0_i32 = arith.constant 0 : i32
    %c0_i32_0 = arith.constant 0 : i32
    %c0_i32_1 = arith.constant 0 : i32
    return %c0_i32, %c0_i32_0 : i32, i32
  }
  func.func @transform_8(%arg0: i32) -> (i32, i32) {
    %c0_i32 = arith.constant 0 : i32
    %c0_i32_0 = arith.constant 0 : i32
    %c0_i32_1 = arith.constant 0 : i32
    return %c0_i32, %c0_i32_0 : i32, i32
  }
  func.func @transform_9(%arg0: i32) -> (i32, i32) {
    %c0_i32 = arith.constant 0 : i32
    %c0_i32_0 = arith.constant 0 : i32
    return %arg0, %c0_i32 : i32, i32
  }
}

</mosaic_0001>

<llo_original>
// kernel: encoder_layer.1
$region0: #{encoder_layer.1}
  #allocation0 [shape = 'u32[]', space=smem, size = 0x4, offset = 0x4, fixed_abs, tag = 'smem constant byte address 0x4 - core index']
  #allocation1 [shape = 'u32[144,128]{1,0:T(1,128)}', space=vmem, size = 0x12000, scoped, tag = 'internal scratch']
  %s0 = inlined_call_operand.vmem [shape: f32[32,128], index: 0, kind: input, shape index: {}]
  %s1 = inlined_call_operand.vmem [shape: f32[128,384], index: 1, kind: input, shape index: {}]
  %s2 = inlined_call_operand.vmem [shape: f32[128,384], index: 2, kind: input, shape index: {}]
  %s3 = inlined_call_operand.vmem [shape: f32[8,384], index: 3, kind: input, shape index: {}]
  %s4 = inlined_call_operand.vmem [shape: f32[512,32], index: 4, kind: input, shape index: {}]
  %s5 = inlined_call_operand.vmem [shape: f32[512,128], index: 5, kind: input, shape index: {}]
  %s6 = inlined_call_operand.hbm [shape: f32[32,512], index: 6, kind: input, shape index: {}]
  %s7 = inlined_call_operand.vmem [shape: f32[512,32], index: 7, kind: input, shape index: {}]
  %s8 = inlined_call_operand.hbm [shape: f32[32,512], index: 8, kind: input, shape index: {}]
  %s9 = inlined_call_operand.hbm [shape: f32[32,128], index: 9, kind: output, shape index: {}]
  %s10 = sld [smem:[#allocation0]]
  $region54: #{encoder_layer.1} parent=0
    _
  %s12 = ssub.s32 1, %s10
  %s13 = scalar_select 0, %s12, %s10
  $region1: #{encoder_layer.1} parent=0
    #allocation2 [shape = 'u8[65536]{0}', space=vmem, size = 0x10000, scoped, tag = 'input window, operand 6, single buffered']
    #allocation3 [shape = 's32[1]{0}', space=sflag, size = 0x4, scoped, tag = 'scoped memory for encoder_layer.1']
    #allocation4 [shape = 's32[1]{0}', space=sflag, size = 0x4, scoped, tag = 'scoped memory for encoder_layer.1']
    #allocation5 [shape = 'u8[65536]{0}', space=vmem, size = 0x10000, scoped, tag = 'input window, operand 8, single buffered']
    #allocation6 [shape = 's32[1]{0}', space=sflag, size = 0x4, scoped, tag = 'scoped memory for encoder_layer.1']
    #allocation7 [shape = 'u8[16384]{0}', space=vmem, size = 0x4000, scoped, tag = 'output window, operand 0, single buffered']
    %14 = vsyncpa [#allocation3], 0
    %15 = vsyncpa [#allocation6], 0
    %16 = vsyncpa [#allocation4], 0
    // Predicated region
    $region2: #{encoder_layer.1} parent=1 // pred_check
      _
    $region3: #{encoder_layer.1} parent=1 // pred_check_branch
      %18 = sbr.rel (0) target = $region5
    $region4: #{encoder_layer.1} parent=1 // pred_region
      _
    $region5: #{encoder_layer.1} parent=1 // pred_fallthru
      _
    // Predicated region
    $region6: #{encoder_layer.1} parent=1 // pred_check
      _
    $region7: #{encoder_layer.1} parent=1 // pred_check_branch
      %20 = sbr.rel (0) target = $region9
    $region8: #{encoder_layer.1} parent=1 // pred_region
      _
    $region9: #{encoder_layer.1} parent=1 // pred_fallthru
      _
    // Predicated region
    $region10: #{encoder_layer.1} parent=1 // pred_check
      _
    $region11: #{encoder_layer.1} parent=1 // pred_check_branch
      %22 = sbr.rel (0) target = $region13
    $region12: #{encoder_layer.1} parent=1 // pred_region
      _
    $region13: #{encoder_layer.1} parent=1 // pred_fallthru
      _
    // Predicated region
    $region14: #{encoder_layer.1} parent=1 // pred_check
      _
    $region15: #{encoder_layer.1} parent=1 // pred_check_branch
      %24 = sbr.rel (0) target = $region17
    $region16: #{encoder_layer.1} parent=1 // pred_region
      _
    $region17: #{encoder_layer.1} parent=1 // pred_fallthru
      _
    // Predicated region
    $region18: #{encoder_layer.1} parent=1 // pred_check
      _
    $region19: #{encoder_layer.1} parent=1 // pred_check_branch
      %26 = sbr.rel (0) target = $region21
    $region20: #{encoder_layer.1} parent=1 // pred_region
      _
    $region21: #{encoder_layer.1} parent=1 // pred_fallthru
      _
    // Predicated region
    $region22: #{encoder_layer.1} parent=1 // pred_check
      _
    $region23: #{encoder_layer.1} parent=1 // pred_check_branch
      %28 = sbr.rel (0) target = $region25
    $region24: #{encoder_layer.1} parent=1 // pred_region
      _
    $region25: #{encoder_layer.1} parent=1 // pred_fallthru
      _
    // Predicated region
    $region26: #{encoder_layer.1} parent=1 // pred_check
      _
    $region27: #{encoder_layer.1} parent=1 // pred_check_branch
      %30 = sbr.rel (0) target = $region29
    $region28: #{encoder_layer.1} parent=1 // pred_region
      %s32 = ssub.s32 2048, 2048
      %33 = vsyncadd [#allocation3], %s32
      %s34 = sshll.u32 [#allocation2], 4
      %s35 = int_to_ptr.vmem [resolvable:$true] %s34
      %40 = dma.hbm_to_vmem [thread:$0]  %s6, 2048, %s35, [#allocation3], 512, 512, 32
    $region29: #{encoder_layer.1} parent=1 // pred_fallthru
      _
    // Predicated region
    $region30: #{encoder_layer.1} parent=1 // pred_check
      _
    $region31: #{encoder_layer.1} parent=1 // pred_check_branch
      %42 = sbr.rel (0) target = $region33
    $region32: #{encoder_layer.1} parent=1 // pred_region
      _
    $region33: #{encoder_layer.1} parent=1 // pred_fallthru
      _
    // Predicated region
    $region34: #{encoder_layer.1} parent=1 // pred_check
      _
    $region35: #{encoder_layer.1} parent=1 // pred_check_branch
      %44 = sbr.rel (0) target = $region37
    $region36: #{encoder_layer.1} parent=1 // pred_region
      %s46 = ssub.s32 2048, 2048
      %47 = vsyncadd [#allocation6], %s46
      %s48 = sshll.u32 [#allocation5], 4
      %s49 = int_to_ptr.vmem [resolvable:$true] %s48
      %54 = dma.hbm_to_vmem [thread:$0]  %s8, 2048, %s49, [#allocation6], 512, 512, 32
    $region37: #{encoder_layer.1} parent=1 // pred_fallthru
      _
    // Predicated region
    $region38: #{encoder_layer.1} parent=1 // pred_check
      _
    $region39: #{encoder_layer.1} parent=1 // pred_check_branch
      %56 = sbr.rel (0) target = $region41
    $region40: #{encoder_layer.1} parent=1 // pred_region
      %57 = dma.done [#allocation3], 2048
    $region41: #{encoder_layer.1} parent=1 // pred_fallthru
      _
    // Predicated region
    $region42: #{encoder_layer.1} parent=1 // pred_check
      _
    $region43: #{encoder_layer.1} parent=1 // pred_check_branch
      %59 = sbr.rel (0) target = $region45
    $region44: #{encoder_layer.1} parent=1 // pred_region
      %60 = dma.done [#allocation6], 2048
    $region45: #{encoder_layer.1} parent=1 // pred_fallthru
      _
    %v61 = vld [vmem:[%s0] sm:$0xff]
    %v62 = vld [vmem:[%s0 + $0x8] sm:$0xff]
    %v63 = vld [vmem:[%s0 + $0x10] sm:$0xff]
    %v64 = vld [vmem:[%s0 + $0x18] sm:$0xff]
    %v65 = vld [vmem:[%s2] sm:$0xff]
    %v66 = vld [vmem:[%s2 + $0x8] sm:$0xff]
    %v67 = vld [vmem:[%s2 + $0x10] sm:$0xff]
    %v68 = vld [vmem:[%s2 + $0x18] sm:$0xff]
    %v69 = vld [vmem:[%s2 + $0x20] sm:$0xff]
    %v70 = vld [vmem:[%s2 + $0x28] sm:$0xff]
    %v71 = vld [vmem:[%s2 + $0x30] sm:$0xff]
    %v72 = vld [vmem:[%s2 + $0x38] sm:$0xff]
    %v73 = vld [vmem:[%s2 + $0x40] sm:$0xff]
    %v74 = vld [vmem:[%s2 + $0x48] sm:$0xff]
    %v75 = vld [vmem:[%s2 + $0x50] sm:$0xff]
    %v76 = vld [vmem:[%s2 + $0x58] sm:$0xff]
    %v77 = vld [vmem:[%s2 + $0x60] sm:$0xff]
    %v78 = vld [vmem:[%s2 + $0x68] sm:$0xff]
    %v79 = vld [vmem:[%s2 + $0x70] sm:$0xff]
    %v80 = vld [vmem:[%s2 + $0x78] sm:$0xff]
    %v81 = vld [vmem:[%s2 + $0x80] sm:$0xff]
    %v82 = vld [vmem:[%s2 + $0x88] sm:$0xff]
    %v83 = vld [vmem:[%s2 + $0x90] sm:$0xff]
    %v84 = vld [vmem:[%s2 + $0x98] sm:$0xff]
    %v85 = vld [vmem:[%s2 + $0xa0] sm:$0xff]
    %v86 = vld [vmem:[%s2 + $0xa8] sm:$0xff]
    %v87 = vld [vmem:[%s2 + $0xb0] sm:$0xff]
    %v88 = vld [vmem:[%s2 + $0xb8] sm:$0xff]
    %v89 = vld [vmem:[%s2 + $0xc0] sm:$0xff]
    %v90 = vld [vmem:[%s2 + $0xc8] sm:$0xff]
    %v91 = vld [vmem:[%s2 + $0xd0] sm:$0xff]
    %v92 = vld [vmem:[%s2 + $0xd8] sm:$0xff]
    %v93 = vld [vmem:[%s2 + $0xe0] sm:$0xff]
    %v94 = vld [vmem:[%s2 + $0xe8] sm:$0xff]
    %v95 = vld [vmem:[%s2 + $0xf0] sm:$0xff]
    %v96 = vld [vmem:[%s2 + $0xf8] sm:$0xff]
    %v97 = vld [vmem:[%s2 + $0x100] sm:$0xff]
    %v98 = vld [vmem:[%s2 + $0x108] sm:$0xff]
    %v99 = vld [vmem:[%s2 + $0x110] sm:$0xff]
    %v100 = vld [vmem:[%s2 + $0x118] sm:$0xff]
    %v101 = vld [vmem:[%s2 + $0x120] sm:$0xff]
    %v102 = vld [vmem:[%s2 + $0x128] sm:$0xff]
    %v103 = vld [vmem:[%s2 + $0x130] sm:$0xff]
    %v104 = vld [vmem:[%s2 + $0x138] sm:$0xff]
    %v105 = vld [vmem:[%s2 + $0x140] sm:$0xff]
    %v106 = vld [vmem:[%s2 + $0x148] sm:$0xff]
    %v107 = vld [vmem:[%s2 + $0x150] sm:$0xff]
    %v108 = vld [vmem:[%s2 + $0x158] sm:$0xff]
    %v109 = vld [vmem:[%s2 + $0x160] sm:$0xff]
    %v110 = vld [vmem:[%s2 + $0x168] sm:$0xff]
    %v111 = vld [vmem:[%s2 + $0x170] sm:$0xff]
    %v112 = vld [vmem:[%s2 + $0x178] sm:$0xff]
    %v113 = vld [vmem:[%s3] sm:$0xff]
    %v114 = vld [vmem:[%s3 + $0x8] sm:$0xff]
    %v115 = vld [vmem:[%s3 + $0x10] sm:$0xff]
    %v116 = vld [vmem:[%s1] sm:$0xff]
    %v117 = vld [vmem:[%s1 + $0x8] sm:$0xff]
    %v118 = vld [vmem:[%s1 + $0x10] sm:$0xff]
    %v119 = vld [vmem:[%s1 + $0x18] sm:$0xff]
    %v120 = vld [vmem:[%s1 + $0x20] sm:$0xff]
    %v121 = vld [vmem:[%s1 + $0x28] sm:$0xff]
    %v122 = vld [vmem:[%s1 + $0x30] sm:$0xff]
    %v123 = vld [vmem:[%s1 + $0x38] sm:$0xff]
    %v124 = vld [vmem:[%s1 + $0x40] sm:$0xff]
    %v125 = vld [vmem:[%s1 + $0x48] sm:$0xff]
    %v126 = vld [vmem:[%s1 + $0x50] sm:$0xff]
    %v127 = vld [vmem:[%s1 + $0x58] sm:$0xff]
    %v128 = vld [vmem:[%s1 + $0x60] sm:$0xff]
    %v129 = vld [vmem:[%s1 + $0x68] sm:$0xff]
    %v130 = vld [vmem:[%s1 + $0x70] sm:$0xff]
    %v131 = vld [vmem:[%s1 + $0x78] sm:$0xff]
    %v132 = vld [vmem:[%s1 + $0x80] sm:$0xff]
    %v133 = vld [vmem:[%s1 + $0x88] sm:$0xff]
    %v134 = vld [vmem:[%s1 + $0x90] sm:$0xff]
    %v135 = vld [vmem:[%s1 + $0x98] sm:$0xff]
    %v136 = vld [vmem:[%s1 + $0xa0] sm:$0xff]
    %v137 = vld [vmem:[%s1 + $0xa8] sm:$0xff]
    %v138 = vld [vmem:[%s1 + $0xb0] sm:$0xff]
    %v139 = vld [vmem:[%s1 + $0xb8] sm:$0xff]
    %v140 = vld [vmem:[%s1 + $0xc0] sm:$0xff]
    %v141 = vld [vmem:[%s1 + $0xc8] sm:$0xff]
    %v142 = vld [vmem:[%s1 + $0xd0] sm:$0xff]
    %v143 = vld [vmem:[%s1 + $0xd8] sm:$0xff]
    %v144 = vld [vmem:[%s1 + $0xe0] sm:$0xff]
    %v145 = vld [vmem:[%s1 + $0xe8] sm:$0xff]
    %v146 = vld [vmem:[%s1 + $0xf0] sm:$0xff]
    %v147 = vld [vmem:[%s1 + $0xf8] sm:$0xff]
    %v148 = vld [vmem:[%s1 + $0x100] sm:$0xff]
    %v149 = vld [vmem:[%s1 + $0x108] sm:$0xff]
    %v150 = vld [vmem:[%s1 + $0x110] sm:$0xff]
    %v151 = vld [vmem:[%s1 + $0x118] sm:$0xff]
    %v152 = vld [vmem:[%s1 + $0x120] sm:$0xff]
    %v153 = vld [vmem:[%s1 + $0x128] sm:$0xff]
    %v154 = vld [vmem:[%s1 + $0x130] sm:$0xff]
    %v155 = vld [vmem:[%s1 + $0x138] sm:$0xff]
    %v156 = vld [vmem:[%s1 + $0x140] sm:$0xff]
    %v157 = vld [vmem:[%s1 + $0x148] sm:$0xff]
    %v158 = vld [vmem:[%s1 + $0x150] sm:$0xff]
    %v159 = vld [vmem:[%s1 + $0x158] sm:$0xff]
    %v160 = vld [vmem:[%s1 + $0x160] sm:$0xff]
    %v161 = vld [vmem:[%s1 + $0x168] sm:$0xff]
    %v162 = vld [vmem:[%s1 + $0x170] sm:$0xff]
    %v163 = vld [vmem:[%s1 + $0x178] sm:$0xff]
    %v164 = vlaneseq
    %v165 = vshrl.u32 %v164, 7
    %v166 = vsub.s32 0, %v165
    %v167 = vrot.slane %v113, %v166
    %v168 = vlaneseq
    %v169 = vshrl.u32 %v168, 7
    %v170 = vsub.s32 0, %v169
    %v171 = vrot.slane %v114, %v170
    %v172 = vlaneseq
    %v173 = vshrl.u32 %v172, 7
    %v174 = vsub.s32 0, %v173
    %v175 = vrot.slane %v115, %v174
    %176 = vmatprep.subr.mxu0 %v162
    %177 = vmatpush1.msra.mxu0 %v161
    %178 = vmatprep.subr.mxu0 %v159
    %179 = vmatpush1.msra.mxu0 %v158
    %180 = vmatprep.subr.mxu0 %v156
    %181 = vmatpush1.msra.mxu0 %v155
    %182 = vmatprep.subr.mxu0 %v153
    %183 = vmatpush1.msra.mxu0 %v152
    %184 = vmatprep.subr.mxu0 %v150
    %185 = vmatpush1.msra.mxu0 %v149
    %186 = vmatprep.subr.mxu0 %v147
    %187 = vmatpush1.msra.mxu0 %v146
    %188 = vmatprep.subr.mxu0 %v144
    %189 = vmatpush1.msra.mxu0 %v143
    %190 = vmatprep.subr.mxu0 %v141
    %191 = vmatpush1.msra.mxu0 %v140
    %192 = vmatprep.subr.mxu0 %v138
    %193 = vmatpush1.msra.mxu0 %v137
    %194 = vmatprep.subr.mxu0 %v135
    %195 = vmatpush1.msra.mxu0 %v134
    %196 = vmatprep.subr.mxu0 %v132
    %197 = vmatpush1.msra.mxu0 %v131
    %198 = vmatprep.subr.mxu0 %v129
    %199 = vmatpush1.msra.mxu0 %v128
    %200 = vmatprep.subr.mxu0 %v126
    %201 = vmatpush1.msra.mxu0 %v125
    %202 = vmatprep.subr.mxu0 %v123
    %203 = vmatpush1.msra.mxu0 %v122
    %204 = vmatprep.subr.mxu0 %v120
    %205 = vmatpush1.msra.mxu0 %v119
    %206 = vmatprep.subr.mxu0 %v117
    %207 = vmatpush1.msra.mxu0 %v116
    %208 = vmatprep.subr.mxu0 0.0
    %209 = vmatpush2.msra.mxu0 0.0
    %210 = vmatprep.subr.mxu0 0.0
    %211 = vmatpush2.msra.mxu0 0.0
    %212 = vmatprep.subr.mxu0 0.0
    %213 = vmatpush2.msra.mxu0 0.0
    %214 = vmatprep.subr.mxu0 0.0
    %215 = vmatpush2.msra.mxu0 0.0
    %216 = vmatprep.subr.mxu0 0.0
    %217 = vmatpush2.msra.mxu0 0.0
    %218 = vmatprep.subr.mxu0 0.0
    %219 = vmatpush2.msra.mxu0 0.0
    %220 = vmatprep.subr.mxu0 0.0
    %221 = vmatpush2.msra.mxu0 0.0
    %222 = vmatprep.subr.mxu0 0.0
    %223 = vmatpush2.msra.mxu0 0.0
    %224 = vmatprep.subr.mxu0 0.0
    %225 = vmatpush2.msra.mxu0 0.0
    %226 = vmatprep.subr.mxu0 0.0
    %227 = vmatpush2.msra.mxu0 0.0
    %228 = vmatprep.subr.mxu0 0.0
    %229 = vmatpush2.msra.mxu0 0.0
    %230 = vmatprep.subr.mxu0 0.0
    %231 = vmatpush2.msra.mxu0 0.0
    %232 = vmatprep.subr.mxu0 0.0
    %233 = vmatpush2.msra.mxu0 0.0
    %234 = vmatprep.subr.mxu0 0.0
    %235 = vmatpush2.msra.mxu0 0.0
    %236 = vmatprep.subr.mxu0 0.0
    %237 = vmatpush2.msra.mxu0 0.0
    %238 = vmatprep.subr.mxu0 0.0
    %239 = vmatpush2.msra.mxu0 0.0
    %240 = vmatprep.mubr.f32.mxu0 0.0
    %241 = vmatmul.mubr.f32.gmra.mxu0 %v61
    %v242 = vpop.f32.mrf.mxu0
    %v243 = vadd.f32 %v167, %v242
    %v244 = vpop.f32.mrf.mxu0
    %v245 = vadd.f32 %v171, %v244
    %246 = vmatprep.mubr.f32.mxu0 0.0
    %247 = vmatmul.mubr.f32.gmra.mxu0 %v62
    %v248 = vpop.f32.mrf.mxu0
    %v249 = vadd.f32 %v167, %v248
    %v250 = vpop.f32.mrf.mxu0
    %v251 = vadd.f32 %v171, %v250
    %252 = vmatprep.mubr.f32.mxu0 0.0
    %253 = vmatmul.mubr.f32.gmra.mxu0 %v63
    %v254 = vpop.f32.mrf.mxu0
    %v255 = vadd.f32 %v167, %v254
    %v256 = vpop.f32.mrf.mxu0
    %v257 = vadd.f32 %v171, %v256
    %258 = vmatprep.mubr.f32.mxu0 0.0
    %259 = vmatmul.mubr.f32.gmra.mxu0 %v64
    %v260 = vpop.f32.mrf.mxu0
    %v261 = vadd.f32 %v167, %v260
    %v262 = vpop.f32.mrf.mxu0
    %v263 = vadd.f32 %v171, %v262
    %264 = vdwg.mxu0
    %265 = vmatprep.subr.mxu0 0.0
    %266 = vmatpush1.msra.mxu0 %v163
    %267 = vmatprep.subr.mxu0 0.0
    %268 = vmatpush1.msra.mxu0 %v160
    %269 = vmatprep.subr.mxu0 0.0
    %270 = vmatpush1.msra.mxu0 %v157
    %271 = vmatprep.subr.mxu0 0.0
    %272 = vmatpush1.msra.mxu0 %v154
    %273 = vmatprep.subr.mxu0 0.0
    %274 = vmatpush1.msra.mxu0 %v151
    %275 = vmatprep.subr.mxu0 0.0
    %276 = vmatpush1.msra.mxu0 %v148
    %277 = vmatprep.subr.mxu0 0.0
    %278 = vmatpush1.msra.mxu0 %v145
    %279 = vmatprep.subr.mxu0 0.0
    %280 = vmatpush1.msra.mxu0 %v142
    %281 = vmatprep.subr.mxu0 0.0
    %282 = vmatpush1.msra.mxu0 %v139
    %283 = vmatprep.subr.mxu0 0.0
    %284 = vmatpush1.msra.mxu0 %v136
    %285 = vmatprep.subr.mxu0 0.0
    %286 = vmatpush1.msra.mxu0 %v133
    %287 = vmatprep.subr.mxu0 0.0
    %288 = vmatpush1.msra.mxu0 %v130
    %289 = vmatprep.subr.mxu0 0.0
    %290 = vmatpush1.msra.mxu0 %v127
    %291 = vmatprep.subr.mxu0 0.0
    %292 = vmatpush1.msra.mxu0 %v124
    %293 = vmatprep.subr.mxu0 0.0
    %294 = vmatpush1.msra.mxu0 %v121
    %295 = vmatprep.subr.mxu0 0.0
    %296 = vmatpush1.msra.mxu0 %v118
    %297 = vmatprep.subr.mxu0 0.0
    %298 = vmatpush2.msra.mxu0 0.0
    %299 = vmatprep.subr.mxu0 0.0
    %300 = vmatpush2.msra.mxu0 0.0
    %301 = vmatprep.subr.mxu0 0.0
    %302 = vmatpush2.msra.mxu0 0.0
    %303 = vmatprep.subr.mxu0 0.0
    %304 = vmatpush2.msra.mxu0 0.0
    %305 = vmatprep.subr.mxu0 0.0
    %306 = vmatpush2.msra.mxu0 0.0
    %307 = vmatprep.subr.mxu0 0.0
    %308 = vmatpush2.msra.mxu0 0.0
    %309 = vmatprep.subr.mxu0 0.0
    %310 = vmatpush2.msra.mxu0 0.0
    %311 = vmatprep.subr.mxu0 0.0
    %312 = vmatpush2.msra.mxu0 0.0
    %313 = vmatprep.subr.mxu0 0.0
    %314 = vmatpush2.msra.mxu0 0.0
    %315 = vmatprep.subr.mxu0 0.0
    %316 = vmatpush2.msra.mxu0 0.0
    %317 = vmatprep.subr.mxu0 0.0
    %318 = vmatpush2.msra.mxu0 0.0
    %319 = vmatprep.subr.mxu0 0.0
    %320 = vmatpush2.msra.mxu0 0.0
    %321 = vmatprep.subr.mxu0 0.0
    %322 = vmatpush2.msra.mxu0 0.0
    %323 = vmatprep.subr.mxu0 0.0
    %324 = vmatpush2.msra.mxu0 0.0
    %325 = vmatprep.subr.mxu0 0.0
    %326 = vmatpush2.msra.mxu0 0.0
    %327 = vmatprep.subr.mxu0 0.0
    %328 = vmatpush2.msra.mxu0 0.0
    %329 = vmatprep.mubr.f32.mxu0 0.0
    %330 = vmatmul.mubr.f32.gmra.mxu0 %v61
    %v331 = vpop.f32.mrf.mxu0
    %v332 = vadd.f32 %v175, %v331
    %v333 = vpop.f32.mrf.mxu0
    %334 = vmatprep.mubr.f32.mxu0 0.0
    %335 = vmatmul.mubr.f32.gmra.mxu0 %v62
    %v336 = vpop.f32.mrf.mxu0
    %v337 = vadd.f32 %v175, %v336
    %v338 = vpop.f32.mrf.mxu0
    %339 = vmatprep.mubr.f32.mxu0 0.0
    %340 = vmatmul.mubr.f32.gmra.mxu0 %v63
    %v341 = vpop.f32.mrf.mxu0
    %v342 = vadd.f32 %v175, %v341
    %v343 = vpop.f32.mrf.mxu0
    %344 = vmatprep.mubr.f32.mxu0 0.0
    %345 = vmatmul.mubr.f32.gmra.mxu0 %v64
    %v346 = vpop.f32.mrf.mxu0
    %v347 = vadd.f32 %v175, %v346
    %v348 = vpop.f32.mrf.mxu0
    %349 = vdwg.mxu0
    %v350 = vld [vmem:[%s5] sm:$0xff]
    %v351 = vld [vmem:[%s5 + $0x8] sm:$0xff]
    %v352 = vld [vmem:[%s5 + $0x10] sm:$0xff]
    %v353 = vld [vmem:[%s5 + $0x18] sm:$0xff]
    %v354 = vld [vmem:[%s5 + $0x20] sm:$0xff]
    %v355 = vld [vmem:[%s5 + $0x28] sm:$0xff]
    %v356 = vld [vmem:[%s5 + $0x30] sm:$0xff]
    %v357 = vld [vmem:[%s5 + $0x38] sm:$0xff]
    %v358 = vld [vmem:[%s5 + $0x40] sm:$0xff]
    %v359 = vld [vmem:[%s5 + $0x48] sm:$0xff]
    %v360 = vld [vmem:[%s5 + $0x50] sm:$0xff]
    %v361 = vld [vmem:[%s5 + $0x58] sm:$0xff]
    %v362 = vld [vmem:[%s5 + $0x60] sm:$0xff]
    %v363 = vld [vmem:[%s5 + $0x68] sm:$0xff]
    %v364 = vld [vmem:[%s5 + $0x70] sm:$0xff]
    %v365 = vld [vmem:[%s5 + $0x78] sm:$0xff]
    %v366 = vld [vmem:[%s5 + $0x80] sm:$0xff]
    %v367 = vld [vmem:[%s5 + $0x88] sm:$0xff]
    %v368 = vld [vmem:[%s5 + $0x90] sm:$0xff]
    %v369 = vld [vmem:[%s5 + $0x98] sm:$0xff]
    %v370 = vld [vmem:[%s5 + $0xa0] sm:$0xff]
    %v371 = vld [vmem:[%s5 + $0xa8] sm:$0xff]
    %v372 = vld [vmem:[%s5 + $0xb0] sm:$0xff]
    %v373 = vld [vmem:[%s5 + $0xb8] sm:$0xff]
    %v374 = vld [vmem:[%s5 + $0xc0] sm:$0xff]
    %v375 = vld [vmem:[%s5 + $0xc8] sm:$0xff]
    %v376 = vld [vmem:[%s5 + $0xd0] sm:$0xff]
    %v377 = vld [vmem:[%s5 + $0xd8] sm:$0xff]
    %v378 = vld [vmem:[%s5 + $0xe0] sm:$0xff]
    %v379 = vld [vmem:[%s5 + $0xe8] sm:$0xff]
    %v380 = vld [vmem:[%s5 + $0xf0] sm:$0xff]
    %v381 = vld [vmem:[%s5 + $0xf8] sm:$0xff]
    %v382 = vld [vmem:[%s5 + $0x100] sm:$0xff]
    %v383 = vld [vmem:[%s5 + $0x108] sm:$0xff]
    %v384 = vld [vmem:[%s5 + $0x110] sm:$0xff]
    %v385 = vld [vmem:[%s5 + $0x118] sm:$0xff]
    %v386 = vld [vmem:[%s5 + $0x120] sm:$0xff]
    %v387 = vld [vmem:[%s5 + $0x128] sm:$0xff]
    %v388 = vld [vmem:[%s5 + $0x130] sm:$0xff]
    %v389 = vld [vmem:[%s5 + $0x138] sm:$0xff]
    %v390 = vld [vmem:[%s5 + $0x140] sm:$0xff]
    %v391 = vld [vmem:[%s5 + $0x148] sm:$0xff]
    %v392 = vld [vmem:[%s5 + $0x150] sm:$0xff]
    %v393 = vld [vmem:[%s5 + $0x158] sm:$0xff]
    %v394 = vld [vmem:[%s5 + $0x160] sm:$0xff]
    %v395 = vld [vmem:[%s5 + $0x168] sm:$0xff]
    %v396 = vld [vmem:[%s5 + $0x170] sm:$0xff]
    %v397 = vld [vmem:[%s5 + $0x178] sm:$0xff]
    %v398 = vld [vmem:[%s5 + $0x180] sm:$0xff]
    %v399 = vld [vmem:[%s5 + $0x188] sm:$0xff]
    %v400 = vld [vmem:[%s5 + $0x190] sm:$0xff]
    %v401 = vld [vmem:[%s5 + $0x198] sm:$0xff]
    %v402 = vld [vmem:[%s5 + $0x1a0] sm:$0xff]
    %v403 = vld [vmem:[%s5 + $0x1a8] sm:$0xff]
    %v404 = vld [vmem:[%s5 + $0x1b0] sm:$0xff]
    %v405 = vld [vmem:[%s5 + $0x1b8] sm:$0xff]
    %v406 = vld [vmem:[%s5 + $0x1c0] sm:$0xff]
    %v407 = vld [vmem:[%s5 + $0x1c8] sm:$0xff]
    %v408 = vld [vmem:[%s5 + $0x1d0] sm:$0xff]
    %v409 = vld [vmem:[%s5 + $0x1d8] sm:$0xff]
    %v410 = vld [vmem:[%s5 + $0x1e0] sm:$0xff]
    %v411 = vld [vmem:[%s5 + $0x1e8] sm:$0xff]
    %v412 = vld [vmem:[%s5 + $0x1f0] sm:$0xff]
    %v413 = vld [vmem:[%s5 + $0x1f8] sm:$0xff]
    %v414 = vld [vmem:[%s4] sm:$0xff]
    %v415 = vld [vmem:[%s4 + $0x8] sm:$0xff]
    %v416 = vld [vmem:[%s4 + $0x10] sm:$0xff]
    %v417 = vld [vmem:[%s4 + $0x18] sm:$0xff]
    %v418 = vld [vmem:[%s4 + $0x20] sm:$0xff]
    %v419 = vld [vmem:[%s4 + $0x28] sm:$0xff]
    %v420 = vld [vmem:[%s4 + $0x30] sm:$0xff]
    %v421 = vld [vmem:[%s4 + $0x38] sm:$0xff]
    %v422 = vld [vmem:[%s4 + $0x40] sm:$0xff]
    %v423 = vld [vmem:[%s4 + $0x48] sm:$0xff]
    %v424 = vld [vmem:[%s4 + $0x50] sm:$0xff]
    %v425 = vld [vmem:[%s4 + $0x58] sm:$0xff]
    %v426 = vld [vmem:[%s4 + $0x60] sm:$0xff]
    %v427 = vld [vmem:[%s4 + $0x68] sm:$0xff]
    %v428 = vld [vmem:[%s4 + $0x70] sm:$0xff]
    %v429 = vld [vmem:[%s4 + $0x78] sm:$0xff]
    %v430 = vld [vmem:[%s4 + $0x80] sm:$0xff]
    %v431 = vld [vmem:[%s4 + $0x88] sm:$0xff]
    %v432 = vld [vmem:[%s4 + $0x90] sm:$0xff]
    %v433 = vld [vmem:[%s4 + $0x98] sm:$0xff]
    %v434 = vld [vmem:[%s4 + $0xa0] sm:$0xff]
    %v435 = vld [vmem:[%s4 + $0xa8] sm:$0xff]
    %v436 = vld [vmem:[%s4 + $0xb0] sm:$0xff]
    %v437 = vld [vmem:[%s4 + $0xb8] sm:$0xff]
    %v438 = vld [vmem:[%s4 + $0xc0] sm:$0xff]
    %v439 = vld [vmem:[%s4 + $0xc8] sm:$0xff]
    %v440 = vld [vmem:[%s4 + $0xd0] sm:$0xff]
    %v441 = vld [vmem:[%s4 + $0xd8] sm:$0xff]
    %v442 = vld [vmem:[%s4 + $0xe0] sm:$0xff]
    %v443 = vld [vmem:[%s4 + $0xe8] sm:$0xff]
    %v444 = vld [vmem:[%s4 + $0xf0] sm:$0xff]
    %v445 = vld [vmem:[%s4 + $0xf8] sm:$0xff]
    %v446 = vld [vmem:[%s4 + $0x100] sm:$0xff]
    %v447 = vld [vmem:[%s4 + $0x108] sm:$0xff]
    %v448 = vld [vmem:[%s4 + $0x110] sm:$0xff]
    %v449 = vld [vmem:[%s4 + $0x118] sm:$0xff]
    %v450 = vld [vmem:[%s4 + $0x120] sm:$0xff]
    %v451 = vld [vmem:[%s4 + $0x128] sm:$0xff]
    %v452 = vld [vmem:[%s4 + $0x130] sm:$0xff]
    %v453 = vld [vmem:[%s4 + $0x138] sm:$0xff]
    %v454 = vld [vmem:[%s4 + $0x140] sm:$0xff]
    %v455 = vld [vmem:[%s4 + $0x148] sm:$0xff]
    %v456 = vld [vmem:[%s4 + $0x150] sm:$0xff]
    %v457 = vld [vmem:[%s4 + $0x158] sm:$0xff]
    %v458 = vld [vmem:[%s4 + $0x160] sm:$0xff]
    %v459 = vld [vmem:[%s4 + $0x168] sm:$0xff]
    %v460 = vld [vmem:[%s4 + $0x170] sm:$0xff]
    %v461 = vld [vmem:[%s4 + $0x178] sm:$0xff]
    %v462 = vld [vmem:[%s4 + $0x180] sm:$0xff]
    %v463 = vld [vmem:[%s4 + $0x188] sm:$0xff]
    %v464 = vld [vmem:[%s4 + $0x190] sm:$0xff]
    %v465 = vld [vmem:[%s4 + $0x198] sm:$0xff]
    %v466 = vld [vmem:[%s4 + $0x1a0] sm:$0xff]
    %v467 = vld [vmem:[%s4 + $0x1a8] sm:$0xff]
    %v468 = vld [vmem:[%s4 + $0x1b0] sm:$0xff]
    %v469 = vld [vmem:[%s4 + $0x1b8] sm:$0xff]
    %v470 = vld [vmem:[%s4 + $0x1c0] sm:$0xff]
    %v471 = vld [vmem:[%s4 + $0x1c8] sm:$0xff]
    %v472 = vld [vmem:[%s4 + $0x1d0] sm:$0xff]
    %v473 = vld [vmem:[%s4 + $0x1d8] sm:$0xff]
    %v474 = vld [vmem:[%s4 + $0x1e0] sm:$0xff]
    %v475 = vld [vmem:[%s4 + $0x1e8] sm:$0xff]
    %v476 = vld [vmem:[%s4 + $0x1f0] sm:$0xff]
    %v477 = vld [vmem:[%s4 + $0x1f8] sm:$0xff]
    %vm478 = vcmask 261120
    %v480 = vsel %vm478, %v414, 0
    %v483 = vsel %vm478, %v415, 0
    %v486 = vsel %vm478, %v416, 0
    %v489 = vsel %vm478, %v417, 0
    %v492 = vsel %vm478, %v418, 0
    %v495 = vsel %vm478, %v419, 0
    %v498 = vsel %vm478, %v420, 0
    %v501 = vsel %vm478, %v421, 0
    %v504 = vsel %vm478, %v422, 0
    %v507 = vsel %vm478, %v423, 0
    %v510 = vsel %vm478, %v424, 0
    %v513 = vsel %vm478, %v425, 0
    %v516 = vsel %vm478, %v426, 0
    %v519 = vsel %vm478, %v427, 0
    %v522 = vsel %vm478, %v428, 0
    %v525 = vsel %vm478, %v429, 0
    %v528 = vsel %vm478, %v430, 0
    %v531 = vsel %vm478, %v431, 0
    %v534 = vsel %vm478, %v432, 0
    %v537 = vsel %vm478, %v433, 0
    %v540 = vsel %vm478, %v434, 0
    %v543 = vsel %vm478, %v435, 0
    %v546 = vsel %vm478, %v436, 0
    %v549 = vsel %vm478, %v437, 0
    %v552 = vsel %vm478, %v438, 0
    %v555 = vsel %vm478, %v439, 0
    %v558 = vsel %vm478, %v440, 0
    %v561 = vsel %vm478, %v441, 0
    %v564 = vsel %vm478, %v442, 0
    %v567 = vsel %vm478, %v443, 0
    %v570 = vsel %vm478, %v444, 0
    %v573 = vsel %vm478, %v445, 0
    %v576 = vsel %vm478, %v446, 0
    %v579 = vsel %vm478, %v447, 0
    %v582 = vsel %vm478, %v448, 0
    %v585 = vsel %vm478, %v449, 0
    %v588 = vsel %vm478, %v450, 0
    %v591 = vsel %vm478, %v451, 0
    %v594 = vsel %vm478, %v452, 0
    %v597 = vsel %vm478, %v453, 0
    %v600 = vsel %vm478, %v454, 0
    %v603 = vsel %vm478, %v455, 0
    %v606 = vsel %vm478, %v456, 0
    %v609 = vsel %vm478, %v457, 0
    %v612 = vsel %vm478, %v458, 0
    %v615 = vsel %vm478, %v459, 0
    %v618 = vsel %vm478, %v460, 0
    %v621 = vsel %vm478, %v461, 0
    %v624 = vsel %vm478, %v462, 0
    %v627 = vsel %vm478, %v463, 0
    %v630 = vsel %vm478, %v464, 0
    %v633 = vsel %vm478, %v465, 0
    %v636 = vsel %vm478, %v466, 0
    %v639 = vsel %vm478, %v467, 0
    %v642 = vsel %vm478, %v468, 0
    %v645 = vsel %vm478, %v469, 0
    %v648 = vsel %vm478, %v470, 0
    %v651 = vsel %vm478, %v471, 0
    %v654 = vsel %vm478, %v472, 0
    %v657 = vsel %vm478, %v473, 0
    %v660 = vsel %vm478, %v474, 0
    %v663 = vsel %vm478, %v475, 0
    %v666 = vsel %vm478, %v476, 0
    %v669 = vsel %vm478, %v477, 0
    %671 = vmatprep.subr.mxu0 0.0
    %672 = vmatpush1.msra.mxu0 0.0
    %673 = vmatprep.subr.mxu0 0.0
    %674 = vmatpush1.msra.mxu0 0.0
    %675 = vmatprep.subr.mxu0 0.0
    %676 = vmatpush1.msra.mxu0 0.0
    %677 = vmatprep.subr.mxu0 0.0
    %678 = vmatpush1.msra.mxu0 0.0
    %679 = vmatprep.subr.mxu0 0.0
    %680 = vmatpush1.msra.mxu0 0.0
    %681 = vmatprep.subr.mxu0 0.0
    %682 = vmatpush1.msra.mxu0 0.0
    %683 = vmatprep.subr.mxu0 0.0
    %684 = vmatpush1.msra.mxu0 0.0
    %685 = vmatprep.subr.mxu0 0.0
    %686 = vmatpush1.msra.mxu0 0.0
    %687 = vmatprep.subr.mxu0 0.0
    %688 = vmatpush1.msra.mxu0 0.0
    %689 = vmatprep.subr.mxu0 0.0
    %690 = vmatpush1.msra.mxu0 0.0
    %691 = vmatprep.subr.mxu0 0.0
    %692 = vmatpush1.msra.mxu0 0.0
    %693 = vmatprep.subr.mxu0 0.0
    %694 = vmatpush1.msra.mxu0 0.0
    %695 = vmatprep.subr.mxu0 %v347
    %696 = vmatpush1.msra.mxu0 %v263
    %697 = vmatprep.subr.mxu0 %v342
    %698 = vmatpush1.msra.mxu0 %v257
    %699 = vmatprep.subr.mxu0 %v337
    %700 = vmatpush1.msra.mxu0 %v251
    %701 = vmatprep.subr.mxu0 %v332
    %702 = vmatpush1.msra.mxu0 %v245
    %703 = vmatprep.subr.mxu0 0.0
    %704 = vmatpush2.msra.mxu0 0.0
    %705 = vmatprep.subr.mxu0 0.0
    %706 = vmatpush2.msra.mxu0 0.0
    %707 = vmatprep.subr.mxu0 0.0
    %708 = vmatpush2.msra.mxu0 0.0
    %709 = vmatprep.subr.mxu0 0.0
    %710 = vmatpush2.msra.mxu0 0.0
    %711 = vmatprep.subr.mxu0 0.0
    %712 = vmatpush2.msra.mxu0 0.0
    %713 = vmatprep.subr.mxu0 0.0
    %714 = vmatpush2.msra.mxu0 0.0
    %715 = vmatprep.subr.mxu0 0.0
    %716 = vmatpush2.msra.mxu0 0.0
    %717 = vmatprep.subr.mxu0 0.0
    %718 = vmatpush2.msra.mxu0 0.0
    %719 = vmatprep.subr.mxu0 0.0
    %720 = vmatpush2.msra.mxu0 0.0
    %721 = vmatprep.subr.mxu0 0.0
    %722 = vmatpush2.msra.mxu0 0.0
    %723 = vmatprep.subr.mxu0 0.0
    %724 = vmatpush2.msra.mxu0 0.0
    %725 = vmatprep.subr.mxu0 0.0
    %726 = vmatpush2.msra.mxu0 0.0
    %727 = vmatprep.subr.mxu0 0.0
    %728 = vmatpush2.msra.mxu0 0.0
    %729 = vmatprep.subr.mxu0 0.0
    %730 = vmatpush2.msra.mxu0 0.0
    %731 = vmatprep.subr.mxu0 0.0
    %732 = vmatpush2.msra.mxu0 0.0
    %733 = vmatprep.subr.mxu0 0.0
    %734 = vmatpush2.msra.mxu0 0.0
    %735 = vmatprep.mubr.f32.mxu0 0.0
    %736 = vmatmul.mubr.f32.gmra.mxu0 %v480
    %v737 = vpop.f32.mrf.mxu0
    %v738 = vadd.f32 0.0, %v737
    %v739 = vpop.f32.mrf.mxu0
    %v740 = vadd.f32 0.0, %v739
    %741 = vmatprep.mubr.f32.mxu0 0.0
    %742 = vmatmul.mubr.f32.gmra.mxu0 %v483
    %v743 = vpop.f32.mrf.mxu0
    %v744 = vadd.f32 0.0, %v743
    %v745 = vpop.f32.mrf.mxu0
    %v746 = vadd.f32 0.0, %v745
    %747 = vmatprep.mubr.f32.mxu0 0.0
    %748 = vmatmul.mubr.f32.gmra.mxu0 %v486
    %v749 = vpop.f32.mrf.mxu0
    %v750 = vadd.f32 0.0, %v749
    %v751 = vpop.f32.mrf.mxu0
    %v752 = vadd.f32 0.0, %v751
    %753 = vmatprep.mubr.f32.mxu0 0.0
    %754 = vmatmul.mubr.f32.gmra.mxu0 %v489
    %v755 = vpop.f32.mrf.mxu0
    %v756 = vadd.f32 0.0, %v755
    %v757 = vpop.f32.mrf.mxu0
    %v758 = vadd.f32 0.0, %v757
    %759 = vmatprep.mubr.f32.mxu0 0.0
    %760 = vmatmul.mubr.f32.gmra.mxu0 %v492
    %v761 = vpop.f32.mrf.mxu0
    %v762 = vadd.f32 0.0, %v761
    %v763 = vpop.f32.mrf.mxu0
    %v764 = vadd.f32 0.0, %v763
    %765 = vmatprep.mubr.f32.mxu0 0.0
    %766 = vmatmul.mubr.f32.gmra.mxu0 %v495
    %v767 = vpop.f32.mrf.mxu0
    %v768 = vadd.f32 0.0, %v767
    %v769 = vpop.f32.mrf.mxu0
    %v770 = vadd.f32 0.0, %v769
    %771 = vmatprep.mubr.f32.mxu0 0.0
    %772 = vmatmul.mubr.f32.gmra.mxu0 %v498
    %v773 = vpop.f32.mrf.mxu0
    %v774 = vadd.f32 0.0, %v773
    %v775 = vpop.f32.mrf.mxu0
    %v776 = vadd.f32 0.0, %v775
    %777 = vmatprep.mubr.f32.mxu0 0.0
    %778 = vmatmul.mubr.f32.gmra.mxu0 %v501
    %v779 = vpop.f32.mrf.mxu0
    %v780 = vadd.f32 0.0, %v779
    %v781 = vpop.f32.mrf.mxu0
    %v782 = vadd.f32 0.0, %v781
    %783 = vmatprep.mubr.f32.mxu0 0.0
    %784 = vmatmul.mubr.f32.gmra.mxu0 %v504
    %v785 = vpop.f32.mrf.mxu0
    %v786 = vadd.f32 0.0, %v785
    %v787 = vpop.f32.mrf.mxu0
    %v788 = vadd.f32 0.0, %v787
    %789 = vmatprep.mubr.f32.mxu0 0.0
    %790 = vmatmul.mubr.f32.gmra.mxu0 %v507
    %v791 = vpop.f32.mrf.mxu0
    %v792 = vadd.f32 0.0, %v791
    %v793 = vpop.f32.mrf.mxu0
    %v794 = vadd.f32 0.0, %v793
    %795 = vmatprep.mubr.f32.mxu0 0.0
    %796 = vmatmul.mubr.f32.gmra.mxu0 %v510
    %v797 = vpop.f32.mrf.mxu0
    %v798 = vadd.f32 0.0, %v797
    %v799 = vpop.f32.mrf.mxu0
    %v800 = vadd.f32 0.0, %v799
    %801 = vmatprep.mubr.f32.mxu0 0.0
    %802 = vmatmul.mubr.f32.gmra.mxu0 %v513
    %v803 = vpop.f32.mrf.mxu0
    %v804 = vadd.f32 0.0, %v803
    %v805 = vpop.f32.mrf.mxu0
    %v806 = vadd.f32 0.0, %v805
    %807 = vmatprep.mubr.f32.mxu0 0.0
    %808 = vmatmul.mubr.f32.gmra.mxu0 %v516
    %v809 = vpop.f32.mrf.mxu0
    %v810 = vadd.f32 0.0, %v809
    %v811 = vpop.f32.mrf.mxu0
    %v812 = vadd.f32 0.0, %v811
    %813 = vmatprep.mubr.f32.mxu0 0.0
    %814 = vmatmul.mubr.f32.gmra.mxu0 %v519
    %v815 = vpop.f32.mrf.mxu0
    %v816 = vadd.f32 0.0, %v815
    %v817 = vpop.f32.mrf.mxu0
    %v818 = vadd.f32 0.0, %v817
    %819 = vmatprep.mubr.f32.mxu0 0.0
    %820 = vmatmul.mubr.f32.gmra.mxu0 %v522
    %v821 = vpop.f32.mrf.mxu0
    %v822 = vadd.f32 0.0, %v821
    %v823 = vpop.f32.mrf.mxu0
    %v824 = vadd.f32 0.0, %v823
    %825 = vmatprep.mubr.f32.mxu0 0.0
    %826 = vmatmul.mubr.f32.gmra.mxu0 %v525
    %v827 = vpop.f32.mrf.mxu0
    %v828 = vadd.f32 0.0, %v827
    %v829 = vpop.f32.mrf.mxu0
    %v830 = vadd.f32 0.0, %v829
    %831 = vmatprep.mubr.f32.mxu0 0.0
    %832 = vmatmul.mubr.f32.gmra.mxu0 %v528
    %v833 = vpop.f32.mrf.mxu0
    %v834 = vadd.f32 0.0, %v833
    %v835 = vpop.f32.mrf.mxu0
    %v836 = vadd.f32 0.0, %v835
    %837 = vmatprep.mubr.f32.mxu0 0.0
    %838 = vmatmul.mubr.f32.gmra.mxu0 %v531
    %v839 = vpop.f32.mrf.mxu0
    %v840 = vadd.f32 0.0, %v839
    %v841 = vpop.f32.mrf.mxu0
    %v842 = vadd.f32 0.0, %v841
    %843 = vmatprep.mubr.f32.mxu0 0.0
    %844 = vmatmul.mubr.f32.gmra.mxu0 %v534
    %v845 = vpop.f32.mrf.mxu0
    %v846 = vadd.f32 0.0, %v845
    %v847 = vpop.f32.mrf.mxu0
    %v848 = vadd.f32 0.0, %v847
    %849 = vmatprep.mubr.f32.mxu0 0.0
    %850 = vmatmul.mubr.f32.gmra.mxu0 %v537
    %v851 = vpop.f32.mrf.mxu0
    %v852 = vadd.f32 0.0, %v851
    %v853 = vpop.f32.mrf.mxu0
    %v854 = vadd.f32 0.0, %v853
    %855 = vmatprep.mubr.f32.mxu0 0.0
    %856 = vmatmul.mubr.f32.gmra.mxu0 %v540
    %v857 = vpop.f32.mrf.mxu0
    %v858 = vadd.f32 0.0, %v857
    %v859 = vpop.f32.mrf.mxu0
    %v860 = vadd.f32 0.0, %v859
    %861 = vmatprep.mubr.f32.mxu0 0.0
    %862 = vmatmul.mubr.f32.gmra.mxu0 %v543
    %v863 = vpop.f32.mrf.mxu0
    %v864 = vadd.f32 0.0, %v863
    %v865 = vpop.f32.mrf.mxu0
    %v866 = vadd.f32 0.0, %v865
    %867 = vmatprep.mubr.f32.mxu0 0.0
    %868 = vmatmul.mubr.f32.gmra.mxu0 %v546
    %v869 = vpop.f32.mrf.mxu0
    %v870 = vadd.f32 0.0, %v869
    %v871 = vpop.f32.mrf.mxu0
    %v872 = vadd.f32 0.0, %v871
    %873 = vmatprep.mubr.f32.mxu0 0.0
    %874 = vmatmul.mubr.f32.gmra.mxu0 %v549
    %v875 = vpop.f32.mrf.mxu0
    %v876 = vadd.f32 0.0, %v875
    %v877 = vpop.f32.mrf.mxu0
    %v878 = vadd.f32 0.0, %v877
    %879 = vmatprep.mubr.f32.mxu0 0.0
    %880 = vmatmul.mubr.f32.gmra.mxu0 %v552
    %v881 = vpop.f32.mrf.mxu0
    %v882 = vadd.f32 0.0, %v881
    %v883 = vpop.f32.mrf.mxu0
    %v884 = vadd.f32 0.0, %v883
    %885 = vmatprep.mubr.f32.mxu0 0.0
    %886 = vmatmul.mubr.f32.gmra.mxu0 %v555
    %v887 = vpop.f32.mrf.mxu0
    %v888 = vadd.f32 0.0, %v887
    %v889 = vpop.f32.mrf.mxu0
    %v890 = vadd.f32 0.0, %v889
    %891 = vmatprep.mubr.f32.mxu0 0.0
    %892 = vmatmul.mubr.f32.gmra.mxu0 %v558
    %v893 = vpop.f32.mrf.mxu0
    %v894 = vadd.f32 0.0, %v893
    %v895 = vpop.f32.mrf.mxu0
    %v896 = vadd.f32 0.0, %v895
    %897 = vmatprep.mubr.f32.mxu0 0.0
    %898 = vmatmul.mubr.f32.gmra.mxu0 %v561
    %v899 = vpop.f32.mrf.mxu0
    %v900 = vadd.f32 0.0, %v899
    %v901 = vpop.f32.mrf.mxu0
    %v902 = vadd.f32 0.0, %v901
    %903 = vmatprep.mubr.f32.mxu0 0.0
    %904 = vmatmul.mubr.f32.gmra.mxu0 %v564
    %v905 = vpop.f32.mrf.mxu0
    %v906 = vadd.f32 0.0, %v905
    %v907 = vpop.f32.mrf.mxu0
    %v908 = vadd.f32 0.0, %v907
    %909 = vmatprep.mubr.f32.mxu0 0.0
    %910 = vmatmul.mubr.f32.gmra.mxu0 %v567
    %v911 = vpop.f32.mrf.mxu0
    %v912 = vadd.f32 0.0, %v911
    %v913 = vpop.f32.mrf.mxu0
    %v914 = vadd.f32 0.0, %v913
    %915 = vmatprep.mubr.f32.mxu0 0.0
    %916 = vmatmul.mubr.f32.gmra.mxu0 %v570
    %v917 = vpop.f32.mrf.mxu0
    %v918 = vadd.f32 0.0, %v917
    %v919 = vpop.f32.mrf.mxu0
    %v920 = vadd.f32 0.0, %v919
    %921 = vmatprep.mubr.f32.mxu0 0.0
    %922 = vmatmul.mubr.f32.gmra.mxu0 %v573
    %v923 = vpop.f32.mrf.mxu0
    %v924 = vadd.f32 0.0, %v923
    %v925 = vpop.f32.mrf.mxu0
    %v926 = vadd.f32 0.0, %v925
    %927 = vmatprep.mubr.f32.mxu0 0.0
    %928 = vmatmul.mubr.f32.gmra.mxu0 %v576
    %v929 = vpop.f32.mrf.mxu0
    %v930 = vadd.f32 0.0, %v929
    %v931 = vpop.f32.mrf.mxu0
    %v932 = vadd.f32 0.0, %v931
    %933 = vmatprep.mubr.f32.mxu0 0.0
    %934 = vmatmul.mubr.f32.gmra.mxu0 %v579
    %v935 = vpop.f32.mrf.mxu0
    %v936 = vadd.f32 0.0, %v935
    %v937 = vpop.f32.mrf.mxu0
    %v938 = vadd.f32 0.0, %v937
    %939 = vmatprep.mubr.f32.mxu0 0.0
    %940 = vmatmul.mubr.f32.gmra.mxu0 %v582
    %v941 = vpop.f32.mrf.mxu0
    %v942 = vadd.f32 0.0, %v941
    %v943 = vpop.f32.mrf.mxu0
    %v944 = vadd.f32 0.0, %v943
    %945 = vmatprep.mubr.f32.mxu0 0.0
    %946 = vmatmul.mubr.f32.gmra.mxu0 %v585
    %v947 = vpop.f32.mrf.mxu0
    %v948 = vadd.f32 0.0, %v947
    %v949 = vpop.f32.mrf.mxu0
    %v950 = vadd.f32 0.0, %v949
    %951 = vmatprep.mubr.f32.mxu0 0.0
    %952 = vmatmul.mubr.f32.gmra.mxu0 %v588
    %v953 = vpop.f32.mrf.mxu0
    %v954 = vadd.f32 0.0, %v953
    %v955 = vpop.f32.mrf.mxu0
    %v956 = vadd.f32 0.0, %v955
    %957 = vmatprep.mubr.f32.mxu0 0.0
    %958 = vmatmul.mubr.f32.gmra.mxu0 %v591
    %v959 = vpop.f32.mrf.mxu0
    %v960 = vadd.f32 0.0, %v959
    %v961 = vpop.f32.mrf.mxu0
    %v962 = vadd.f32 0.0, %v961
    %963 = vmatprep.mubr.f32.mxu0 0.0
    %964 = vmatmul.mubr.f32.gmra.mxu0 %v594
    %v965 = vpop.f32.mrf.mxu0
    %v966 = vadd.f32 0.0, %v965
    %v967 = vpop.f32.mrf.mxu0
    %v968 = vadd.f32 0.0, %v967
    %969 = vmatprep.mubr.f32.mxu0 0.0
    %970 = vmatmul.mubr.f32.gmra.mxu0 %v597
    %v971 = vpop.f32.mrf.mxu0
    %v972 = vadd.f32 0.0, %v971
    %v973 = vpop.f32.mrf.mxu0
    %v974 = vadd.f32 0.0, %v973
    %975 = vmatprep.mubr.f32.mxu0 0.0
    %976 = vmatmul.mubr.f32.gmra.mxu0 %v600
    %v977 = vpop.f32.mrf.mxu0
    %v978 = vadd.f32 0.0, %v977
    %v979 = vpop.f32.mrf.mxu0
    %v980 = vadd.f32 0.0, %v979
    %981 = vmatprep.mubr.f32.mxu0 0.0
    %982 = vmatmul.mubr.f32.gmra.mxu0 %v603
    %v983 = vpop.f32.mrf.mxu0
    %v984 = vadd.f32 0.0, %v983
    %v985 = vpop.f32.mrf.mxu0
    %v986 = vadd.f32 0.0, %v985
    %987 = vmatprep.mubr.f32.mxu0 0.0
    %988 = vmatmul.mubr.f32.gmra.mxu0 %v606
    %v989 = vpop.f32.mrf.mxu0
    %v990 = vadd.f32 0.0, %v989
    %v991 = vpop.f32.mrf.mxu0
    %v992 = vadd.f32 0.0, %v991
    %993 = vmatprep.mubr.f32.mxu0 0.0
    %994 = vmatmul.mubr.f32.gmra.mxu0 %v609
    %v995 = vpop.f32.mrf.mxu0
    %v996 = vadd.f32 0.0, %v995
    %v997 = vpop.f32.mrf.mxu0
    %v998 = vadd.f32 0.0, %v997
    %999 = vmatprep.mubr.f32.mxu0 0.0
    %1000 = vmatmul.mubr.f32.gmra.mxu0 %v612
    %v1001 = vpop.f32.mrf.mxu0
    %v1002 = vadd.f32 0.0, %v1001
    %v1003 = vpop.f32.mrf.mxu0
    %v1004 = vadd.f32 0.0, %v1003
    %1005 = vmatprep.mubr.f32.mxu0 0.0
    %1006 = vmatmul.mubr.f32.gmra.mxu0 %v615
    %v1007 = vpop.f32.mrf.mxu0
    %v1008 = vadd.f32 0.0, %v1007
    %v1009 = vpop.f32.mrf.mxu0
    %v1010 = vadd.f32 0.0, %v1009
    %1011 = vmatprep.mubr.f32.mxu0 0.0
    %1012 = vmatmul.mubr.f32.gmra.mxu0 %v618
    %v1013 = vpop.f32.mrf.mxu0
    %v1014 = vadd.f32 0.0, %v1013
    %v1015 = vpop.f32.mrf.mxu0
    %v1016 = vadd.f32 0.0, %v1015
    %1017 = vmatprep.mubr.f32.mxu0 0.0
    %1018 = vmatmul.mubr.f32.gmra.mxu0 %v621
    %v1019 = vpop.f32.mrf.mxu0
    %v1020 = vadd.f32 0.0, %v1019
    %v1021 = vpop.f32.mrf.mxu0
    %v1022 = vadd.f32 0.0, %v1021
    %1023 = vmatprep.mubr.f32.mxu0 0.0
    %1024 = vmatmul.mubr.f32.gmra.mxu0 %v624
    %v1025 = vpop.f32.mrf.mxu0
    %v1026 = vadd.f32 0.0, %v1025
    %v1027 = vpop.f32.mrf.mxu0
    %v1028 = vadd.f32 0.0, %v1027
    %1029 = vmatprep.mubr.f32.mxu0 0.0
    %1030 = vmatmul.mubr.f32.gmra.mxu0 %v627
    %v1031 = vpop.f32.mrf.mxu0
    %v1032 = vadd.f32 0.0, %v1031
    %v1033 = vpop.f32.mrf.mxu0
    %v1034 = vadd.f32 0.0, %v1033
    %1035 = vmatprep.mubr.f32.mxu0 0.0
    %1036 = vmatmul.mubr.f32.gmra.mxu0 %v630
    %v1037 = vpop.f32.mrf.mxu0
    %v1038 = vadd.f32 0.0, %v1037
    %v1039 = vpop.f32.mrf.mxu0
    %v1040 = vadd.f32 0.0, %v1039
    %1041 = vmatprep.mubr.f32.mxu0 0.0
    %1042 = vmatmul.mubr.f32.gmra.mxu0 %v633
    %v1043 = vpop.f32.mrf.mxu0
    %v1044 = vadd.f32 0.0, %v1043
    %v1045 = vpop.f32.mrf.mxu0
    %v1046 = vadd.f32 0.0, %v1045
    %1047 = vmatprep.mubr.f32.mxu0 0.0
    %1048 = vmatmul.mubr.f32.gmra.mxu0 %v636
    %v1049 = vpop.f32.mrf.mxu0
    %v1050 = vadd.f32 0.0, %v1049
    %v1051 = vpop.f32.mrf.mxu0
    %v1052 = vadd.f32 0.0, %v1051
    %1053 = vmatprep.mubr.f32.mxu0 0.0
    %1054 = vmatmul.mubr.f32.gmra.mxu0 %v639
    %v1055 = vpop.f32.mrf.mxu0
    %v1056 = vadd.f32 0.0, %v1055
    %v1057 = vpop.f32.mrf.mxu0
    %v1058 = vadd.f32 0.0, %v1057
    %1059 = vmatprep.mubr.f32.mxu0 0.0
    %1060 = vmatmul.mubr.f32.gmra.mxu0 %v642
    %v1061 = vpop.f32.mrf.mxu0
    %v1062 = vadd.f32 0.0, %v1061
    %v1063 = vpop.f32.mrf.mxu0
    %v1064 = vadd.f32 0.0, %v1063
    %1065 = vmatprep.mubr.f32.mxu0 0.0
    %1066 = vmatmul.mubr.f32.gmra.mxu0 %v645
    %v1067 = vpop.f32.mrf.mxu0
    %v1068 = vadd.f32 0.0, %v1067
    %v1069 = vpop.f32.mrf.mxu0
    %v1070 = vadd.f32 0.0, %v1069
    %1071 = vmatprep.mubr.f32.mxu0 0.0
    %1072 = vmatmul.mubr.f32.gmra.mxu0 %v648
    %v1073 = vpop.f32.mrf.mxu0
    %v1074 = vadd.f32 0.0, %v1073
    %v1075 = vpop.f32.mrf.mxu0
    %v1076 = vadd.f32 0.0, %v1075
    %1077 = vmatprep.mubr.f32.mxu0 0.0
    %1078 = vmatmul.mubr.f32.gmra.mxu0 %v651
    %v1079 = vpop.f32.mrf.mxu0
    %v1080 = vadd.f32 0.0, %v1079
    %v1081 = vpop.f32.mrf.mxu0
    %v1082 = vadd.f32 0.0, %v1081
    %1083 = vmatprep.mubr.f32.mxu0 0.0
    %1084 = vmatmul.mubr.f32.gmra.mxu0 %v654
    %v1085 = vpop.f32.mrf.mxu0
    %v1086 = vadd.f32 0.0, %v1085
    %v1087 = vpop.f32.mrf.mxu0
    %v1088 = vadd.f32 0.0, %v1087
    %1089 = vmatprep.mubr.f32.mxu0 0.0
    %1090 = vmatmul.mubr.f32.gmra.mxu0 %v657
    %v1091 = vpop.f32.mrf.mxu0
    %v1092 = vadd.f32 0.0, %v1091
    %v1093 = vpop.f32.mrf.mxu0
    %v1094 = vadd.f32 0.0, %v1093
    %1095 = vmatprep.mubr.f32.mxu0 0.0
    %1096 = vmatmul.mubr.f32.gmra.mxu0 %v660
    %v1097 = vpop.f32.mrf.mxu0
    %v1098 = vadd.f32 0.0, %v1097
    %v1099 = vpop.f32.mrf.mxu0
    %v1100 = vadd.f32 0.0, %v1099
    %1101 = vmatprep.mubr.f32.mxu0 0.0
    %1102 = vmatmul.mubr.f32.gmra.mxu0 %v663
    %v1103 = vpop.f32.mrf.mxu0
    %v1104 = vadd.f32 0.0, %v1103
    %v1105 = vpop.f32.mrf.mxu0
    %v1106 = vadd.f32 0.0, %v1105
    %1107 = vmatprep.mubr.f32.mxu0 0.0
    %1108 = vmatmul.mubr.f32.gmra.mxu0 %v666
    %v1109 = vpop.f32.mrf.mxu0
    %v1110 = vadd.f32 0.0, %v1109
    %v1111 = vpop.f32.mrf.mxu0
    %v1112 = vadd.f32 0.0, %v1111
    %1113 = vmatprep.mubr.f32.mxu0 0.0
    %1114 = vmatmul.mubr.f32.gmra.mxu0 %v669
    %v1115 = vpop.f32.mrf.mxu0
    %v1116 = vadd.f32 0.0, %v1115
    %v1117 = vpop.f32.mrf.mxu0
    %v1118 = vadd.f32 0.0, %v1117
    %1119 = vdwg.mxu0
    %v1120 = vmul.f32 %v738, %v350
    %v1121 = vmul.f32 %v744, %v351
    %v1122 = vmul.f32 %v750, %v352
    %v1123 = vmul.f32 %v756, %v353
    %v1124 = vmul.f32 %v762, %v354
    %v1125 = vmul.f32 %v768, %v355
    %v1126 = vmul.f32 %v774, %v356
    %v1127 = vmul.f32 %v780, %v357
    %v1128 = vmul.f32 %v786, %v358
    %v1129 = vmul.f32 %v792, %v359
    %v1130 = vmul.f32 %v798, %v360
    %v1131 = vmul.f32 %v804, %v361
    %v1132 = vmul.f32 %v810, %v362
    %v1133 = vmul.f32 %v816, %v363
    %v1134 = vmul.f32 %v822, %v364
    %v1135 = vmul.f32 %v828, %v365
    %v1136 = vmul.f32 %v834, %v366
    %v1137 = vmul.f32 %v840, %v367
    %v1138 = vmul.f32 %v846, %v368
    %v1139 = vmul.f32 %v852, %v369
    %v1140 = vmul.f32 %v858, %v370
    %v1141 = vmul.f32 %v864, %v371
    %v1142 = vmul.f32 %v870, %v372
    %v1143 = vmul.f32 %v876, %v373
    %v1144 = vmul.f32 %v882, %v374
    %v1145 = vmul.f32 %v888, %v375
    %v1146 = vmul.f32 %v894, %v376
    %v1147 = vmul.f32 %v900, %v377
    %v1148 = vmul.f32 %v906, %v378
    %v1149 = vmul.f32 %v912, %v379
    %v1150 = vmul.f32 %v918, %v380
    %v1151 = vmul.f32 %v924, %v381
    %v1152 = vmul.f32 %v930, %v382
    %v1153 = vmul.f32 %v936, %v383
    %v1154 = vmul.f32 %v942, %v384
    %v1155 = vmul.f32 %v948, %v385
    %v1156 = vmul.f32 %v954, %v386
    %v1157 = vmul.f32 %v960, %v387
    %v1158 = vmul.f32 %v966, %v388
    %v1159 = vmul.f32 %v972, %v389
    %v1160 = vmul.f32 %v978, %v390
    %v1161 = vmul.f32 %v984, %v391
    %v1162 = vmul.f32 %v990, %v392
    %v1163 = vmul.f32 %v996, %v393
    %v1164 = vmul.f32 %v1002, %v394
    %v1165 = vmul.f32 %v1008, %v395
    %v1166 = vmul.f32 %v1014, %v396
    %v1167 = vmul.f32 %v1020, %v397
    %v1168 = vmul.f32 %v1026, %v398
    %v1169 = vmul.f32 %v1032, %v399
    %v1170 = vmul.f32 %v1038, %v400
    %v1171 = vmul.f32 %v1044, %v401
    %v1172 = vmul.f32 %v1050, %v402
    %v1173 = vmul.f32 %v1056, %v403
    %v1174 = vmul.f32 %v1062, %v404
    %v1175 = vmul.f32 %v1068, %v405
    %v1176 = vmul.f32 %v1074, %v406
    %v1177 = vmul.f32 %v1080, %v407
    %v1178 = vmul.f32 %v1086, %v408
    %v1179 = vmul.f32 %v1092, %v409
    %v1180 = vmul.f32 %v1098, %v410
    %v1181 = vmul.f32 %v1104, %v411
    %v1182 = vmul.f32 %v1110, %v412
    %v1183 = vmul.f32 %v1116, %v413
    %v1184 = vmul.f32 %v740, %v350
    %v1185 = vmul.f32 %v746, %v351
    %v1186 = vmul.f32 %v752, %v352
    %v1187 = vmul.f32 %v758, %v353
    %v1188 = vmul.f32 %v764, %v354
    %v1189 = vmul.f32 %v770, %v355
    %v1190 = vmul.f32 %v776, %v356
    %v1191 = vmul.f32 %v782, %v357
    %v1192 = vmul.f32 %v788, %v358
    %v1193 = vmul.f32 %v794, %v359
    %v1194 = vmul.f32 %v800, %v360
    %v1195 = vmul.f32 %v806, %v361
    %v1196 = vmul.f32 %v812, %v362
    %v1197 = vmul.f32 %v818, %v363
    %v1198 = vmul.f32 %v824, %v364
    %v1199 = vmul.f32 %v830, %v365
    %v1200 = vmul.f32 %v836, %v366
    %v1201 = vmul.f32 %v842, %v367
    %v1202 = vmul.f32 %v848, %v368
    %v1203 = vmul.f32 %v854, %v369
    %v1204 = vmul.f32 %v860, %v370
    %v1205 = vmul.f32 %v866, %v371
    %v1206 = vmul.f32 %v872, %v372
    %v1207 = vmul.f32 %v878, %v373
    %v1208 = vmul.f32 %v884, %v374
    %v1209 = vmul.f32 %v890, %v375
    %v1210 = vmul.f32 %v896, %v376
    %v1211 = vmul.f32 %v902, %v377
    %v1212 = vmul.f32 %v908, %v378
    %v1213 = vmul.f32 %v914, %v379
    %v1214 = vmul.f32 %v920, %v380
    %v1215 = vmul.f32 %v926, %v381
    %v1216 = vmul.f32 %v932, %v382
    %v1217 = vmul.f32 %v938, %v383
    %v1218 = vmul.f32 %v944, %v384
    %v1219 = vmul.f32 %v950, %v385
    %v1220 = vmul.f32 %v956, %v386
    %v1221 = vmul.f32 %v962, %v387
    %v1222 = vmul.f32 %v968, %v388
    %v1223 = vmul.f32 %v974, %v389
    %v1224 = vmul.f32 %v980, %v390
    %v1225 = vmul.f32 %v986, %v391
    %v1226 = vmul.f32 %v992, %v392
    %v1227 = vmul.f32 %v998, %v393
    %v1228 = vmul.f32 %v1004, %v394
    %v1229 = vmul.f32 %v1010, %v395
    %v1230 = vmul.f32 %v1016, %v396
    %v1231 = vmul.f32 %v1022, %v397
    %v1232 = vmul.f32 %v1028, %v398
    %v1233 = vmul.f32 %v1034, %v399
    %v1234 = vmul.f32 %v1040, %v400
    %v1235 = vmul.f32 %v1046, %v401
    %v1236 = vmul.f32 %v1052, %v402
    %v1237 = vmul.f32 %v1058, %v403
    %v1238 = vmul.f32 %v1064, %v404
    %v1239 = vmul.f32 %v1070, %v405
    %v1240 = vmul.f32 %v1076, %v406
    %v1241 = vmul.f32 %v1082, %v407
    %v1242 = vmul.f32 %v1088, %v408
    %v1243 = vmul.f32 %v1094, %v409
    %v1244 = vmul.f32 %v1100, %v410
    %v1245 = vmul.f32 %v1106, %v411
    %v1246 = vmul.f32 %v1112, %v412
    %v1247 = vmul.f32 %v1118, %v413
    %1248 = vmatprep.subr.mxu0 0.0
    %1249 = vmatpush1.xpose.msra.mxu0 %v1135
    %1250 = vmatprep.subr.mxu0 0.0
    %1251 = vmatpush1.xpose.msra.mxu0 %v1134
    %1252 = vmatprep.subr.mxu0 0.0
    %1253 = vmatpush1.xpose.msra.mxu0 %v1133
    %1254 = vmatprep.subr.mxu0 0.0
    %1255 = vmatpush1.xpose.msra.mxu0 %v1132
    %1256 = vmatprep.subr.mxu0 0.0
    %1257 = vmatpush1.xpose.msra.mxu0 %v1131
    %1258 = vmatprep.subr.mxu0 0.0
    %1259 = vmatpush1.xpose.msra.mxu0 %v1130
    %1260 = vmatprep.subr.mxu0 0.0
    %1261 = vmatpush1.xpose.msra.mxu0 %v1129
    %1262 = vmatprep.subr.mxu0 0.0
    %1263 = vmatpush1.xpose.msra.mxu0 %v1128
    %1264 = vmatprep.subr.mxu0 0.0
    %1265 = vmatpush1.xpose.msra.mxu0 %v1127
    %1266 = vmatprep.subr.mxu0 0.0
    %1267 = vmatpush1.xpose.msra.mxu0 %v1126
    %1268 = vmatprep.subr.mxu0 0.0
    %1269 = vmatpush1.xpose.msra.mxu0 %v1125
    %1270 = vmatprep.subr.mxu0 0.0
    %1271 = vmatpush1.xpose.msra.mxu0 %v1124
    %1272 = vmatprep.subr.mxu0 0.0
    %1273 = vmatpush1.xpose.msra.mxu0 %v1123
    %1274 = vmatprep.subr.mxu0 0.0
    %1275 = vmatpush1.xpose.msra.mxu0 %v1122
    %1276 = vmatprep.subr.mxu0 0.0
    %1277 = vmatpush1.xpose.msra.mxu0 %v1121
    %1278 = vmatprep.subr.mxu0 0.0
    %1279 = vmatpush1.xpose.msra.mxu0 %v1120
    %1280 = vmatprep.subr.mxu0 0.0
    %1281 = vmatpush2.xpose.msra.mxu0 %v1151
    %1282 = vmatprep.subr.mxu0 0.0
    %1283 = vmatpush2.xpose.msra.mxu0 %v1150
    %1284 = vmatprep.subr.mxu0 0.0
    %1285 = vmatpush2.xpose.msra.mxu0 %v1149
    %1286 = vmatprep.subr.mxu0 0.0
    %1287 = vmatpush2.xpose.msra.mxu0 %v1148
    %1288 = vmatprep.subr.mxu0 0.0
    %1289 = vmatpush2.xpose.msra.mxu0 %v1147
    %1290 = vmatprep.subr.mxu0 0.0
    %1291 = vmatpush2.xpose.msra.mxu0 %v1146
    %1292 = vmatprep.subr.mxu0 0.0
    %1293 = vmatpush2.xpose.msra.mxu0 %v1145
    %1294 = vmatprep.subr.mxu0 0.0
    %1295 = vmatpush2.xpose.msra.mxu0 %v1144
    %1296 = vmatprep.subr.mxu0 0.0
    %1297 = vmatpush2.xpose.msra.mxu0 %v1143
    %1298 = vmatprep.subr.mxu0 0.0
    %1299 = vmatpush2.xpose.msra.mxu0 %v1142
    %1300 = vmatprep.subr.mxu0 0.0
    %1301 = vmatpush2.xpose.msra.mxu0 %v1141
    %1302 = vmatprep.subr.mxu0 0.0
    %1303 = vmatpush2.xpose.msra.mxu0 %v1140
    %1304 = vmatprep.subr.mxu0 0.0
    %1305 = vmatpush2.xpose.msra.mxu0 %v1139
    %1306 = vmatprep.subr.mxu0 0.0
    %1307 = vmatpush2.xpose.msra.mxu0 %v1138
    %1308 = vmatprep.subr.mxu0 0.0
    %1309 = vmatpush2.xpose.msra.mxu0 %v1137
    %1310 = vmatprep.subr.mxu0 0.0
    %1311 = vmatpush2.xpose.msra.mxu0 %v1136
    %1312 = vmatprep.mubr.f32.mxu0 0.0
    %1313 = vmatmul.mubr.f32.gmra.mxu0 %v243
    %v1314 = vpop.f32.mrf.mxu0
    %v1315 = vadd.f32 0.0, %v1314
    %v1316 = vpop.f32.mrf.mxu0
    %v1317 = vadd.f32 0.0, %v1316
    %1318 = vmatprep.mubr.f32.mxu0 0.0
    %1319 = vmatmul.mubr.f32.gmra.mxu0 %v249
    %v1320 = vpop.f32.mrf.mxu0
    %v1321 = vadd.f32 0.0, %v1320
    %v1322 = vpop.f32.mrf.mxu0
    %v1323 = vadd.f32 0.0, %v1322
    %1324 = vmatprep.mubr.f32.mxu0 0.0
    %1325 = vmatmul.mubr.f32.gmra.mxu0 %v255
    %v1326 = vpop.f32.mrf.mxu0
    %v1327 = vadd.f32 0.0, %v1326
    %v1328 = vpop.f32.mrf.mxu0
    %v1329 = vadd.f32 0.0, %v1328
    %1330 = vmatprep.mubr.f32.mxu0 0.0
    %1331 = vmatmul.mubr.f32.gmra.mxu0 %v261
    %v1332 = vpop.f32.mrf.mxu0
    %v1333 = vadd.f32 0.0, %v1332
    %v1334 = vpop.f32.mrf.mxu0
    %v1335 = vadd.f32 0.0, %v1334
    %1336 = vdwg.mxu0
    %1337 = vmatprep.subr.mxu0 0.0
    %1338 = vmatpush1.xpose.msra.mxu0 %v1167
    %1339 = vmatprep.subr.mxu0 0.0
    %1340 = vmatpush1.xpose.msra.mxu0 %v1166
    %1341 = vmatprep.subr.mxu0 0.0
    %1342 = vmatpush1.xpose.msra.mxu0 %v1165
    %1343 = vmatprep.subr.mxu0 0.0
    %1344 = vmatpush1.xpose.msra.mxu0 %v1164
    %1345 = vmatprep.subr.mxu0 0.0
    %1346 = vmatpush1.xpose.msra.mxu0 %v1163
    %1347 = vmatprep.subr.mxu0 0.0
    %1348 = vmatpush1.xpose.msra.mxu0 %v1162
    %1349 = vmatprep.subr.mxu0 0.0
    %1350 = vmatpush1.xpose.msra.mxu0 %v1161
    %1351 = vmatprep.subr.mxu0 0.0
    %1352 = vmatpush1.xpose.msra.mxu0 %v1160
    %1353 = vmatprep.subr.mxu0 0.0
    %1354 = vmatpush1.xpose.msra.mxu0 %v1159
    %1355 = vmatprep.subr.mxu0 0.0
    %1356 = vmatpush1.xpose.msra.mxu0 %v1158
    %1357 = vmatprep.subr.mxu0 0.0
    %1358 = vmatpush1.xpose.msra.mxu0 %v1157
    %1359 = vmatprep.subr.mxu0 0.0
    %1360 = vmatpush1.xpose.msra.mxu0 %v1156
    %1361 = vmatprep.subr.mxu0 0.0
    %1362 = vmatpush1.xpose.msra.mxu0 %v1155
    %1363 = vmatprep.subr.mxu0 0.0
    %1364 = vmatpush1.xpose.msra.mxu0 %v1154
    %1365 = vmatprep.subr.mxu0 0.0
    %1366 = vmatpush1.xpose.msra.mxu0 %v1153
    %1367 = vmatprep.subr.mxu0 0.0
    %1368 = vmatpush1.xpose.msra.mxu0 %v1152
    %1369 = vmatprep.subr.mxu0 0.0
    %1370 = vmatpush2.xpose.msra.mxu0 %v1183
    %1371 = vmatprep.subr.mxu0 0.0
    %1372 = vmatpush2.xpose.msra.mxu0 %v1182
    %1373 = vmatprep.subr.mxu0 0.0
    %1374 = vmatpush2.xpose.msra.mxu0 %v1181
    %1375 = vmatprep.subr.mxu0 0.0
    %1376 = vmatpush2.xpose.msra.mxu0 %v1180
    %1377 = vmatprep.subr.mxu0 0.0
    %1378 = vmatpush2.xpose.msra.mxu0 %v1179
    %1379 = vmatprep.subr.mxu0 0.0
    %1380 = vmatpush2.xpose.msra.mxu0 %v1178
    %1381 = vmatprep.subr.mxu0 0.0
    %1382 = vmatpush2.xpose.msra.mxu0 %v1177
    %1383 = vmatprep.subr.mxu0 0.0
    %1384 = vmatpush2.xpose.msra.mxu0 %v1176
    %1385 = vmatprep.subr.mxu0 0.0
    %1386 = vmatpush2.xpose.msra.mxu0 %v1175
    %1387 = vmatprep.subr.mxu0 0.0
    %1388 = vmatpush2.xpose.msra.mxu0 %v1174
    %1389 = vmatprep.subr.mxu0 0.0
    %1390 = vmatpush2.xpose.msra.mxu0 %v1173
    %1391 = vmatprep.subr.mxu0 0.0
    %1392 = vmatpush2.xpose.msra.mxu0 %v1172
    %1393 = vmatprep.subr.mxu0 0.0
    %1394 = vmatpush2.xpose.msra.mxu0 %v1171
    %1395 = vmatprep.subr.mxu0 0.0
    %1396 = vmatpush2.xpose.msra.mxu0 %v1170
    %1397 = vmatprep.subr.mxu0 0.0
    %1398 = vmatpush2.xpose.msra.mxu0 %v1169
    %1399 = vmatprep.subr.mxu0 0.0
    %1400 = vmatpush2.xpose.msra.mxu0 %v1168
    %1401 = vmatprep.mubr.f32.mxu0 0.0
    %1402 = vmatmul.mubr.f32.gmra.mxu0 %v243
    %v1403 = vpop.f32.mrf.mxu0
    %v1404 = vadd.f32 0.0, %v1403
    %v1405 = vpop.f32.mrf.mxu0
    %v1406 = vadd.f32 0.0, %v1405
    %1407 = vmatprep.mubr.f32.mxu0 0.0
    %1408 = vmatmul.mubr.f32.gmra.mxu0 %v249
    %v1409 = vpop.f32.mrf.mxu0
    %v1410 = vadd.f32 0.0, %v1409
    %v1411 = vpop.f32.mrf.mxu0
    %v1412 = vadd.f32 0.0, %v1411
    %1413 = vmatprep.mubr.f32.mxu0 0.0
    %1414 = vmatmul.mubr.f32.gmra.mxu0 %v255
    %v1415 = vpop.f32.mrf.mxu0
    %v1416 = vadd.f32 0.0, %v1415
    %v1417 = vpop.f32.mrf.mxu0
    %v1418 = vadd.f32 0.0, %v1417
    %1419 = vmatprep.mubr.f32.mxu0 0.0
    %1420 = vmatmul.mubr.f32.gmra.mxu0 %v261
    %v1421 = vpop.f32.mrf.mxu0
    %v1422 = vadd.f32 0.0, %v1421
    %v1423 = vpop.f32.mrf.mxu0
    %v1424 = vadd.f32 0.0, %v1423
    %1425 = vdwg.mxu0
    %v1426 = vmax.f32 %v1315, %v1317
    %v1427 = vmax.f32 %v1426, %v1404
    %v1428 = vmax.f32 %v1427, %v1406
    %1429 = vmax.xlane.f32.xlu0 %v1428
    %v1430 = vpop.xlane.xlu0 %1429
    %v1431 = vmax.f32 %v1321, %v1323
    %v1432 = vmax.f32 %v1431, %v1410
    %v1433 = vmax.f32 %v1432, %v1412
    %1434 = vmax.xlane.f32.xlu0 %v1433
    %v1435 = vpop.xlane.xlu0 %1434
    %v1436 = vmax.f32 %v1327, %v1329
    %v1437 = vmax.f32 %v1436, %v1416
    %v1438 = vmax.f32 %v1437, %v1418
    %1439 = vmax.xlane.f32.xlu0 %v1438
    %v1440 = vpop.xlane.xlu0 %1439
    %v1441 = vmax.f32 %v1333, %v1335
    %v1442 = vmax.f32 %v1441, %v1422
    %v1443 = vmax.f32 %v1442, %v1424
    %1444 = vmax.xlane.f32.xlu0 %v1443
    %v1445 = vpop.xlane.xlu0 %1444
    %v1446 = vsub.f32 %v1315, %v1430
    %v1447 = vsub.f32 %v1317, %v1430
    %v1448 = vsub.f32 %v1404, %v1430
    %v1449 = vsub.f32 %v1406, %v1430
    %v1450 = vsub.f32 %v1321, %v1435
    %v1451 = vsub.f32 %v1323, %v1435
    %v1452 = vsub.f32 %v1410, %v1435
    %v1453 = vsub.f32 %v1412, %v1435
    %v1454 = vsub.f32 %v1327, %v1440
    %v1455 = vsub.f32 %v1329, %v1440
    %v1456 = vsub.f32 %v1416, %v1440
    %v1457 = vsub.f32 %v1418, %v1440
    %v1458 = vsub.f32 %v1333, %v1445
    %v1459 = vsub.f32 %v1335, %v1445
    %v1460 = vsub.f32 %v1422, %v1445
    %v1461 = vsub.f32 %v1424, %v1445
    %v1462 = vmul.f32 %v1446, 1.442695
    %v1463 = vpow.pop %v1462
    %v1464 = vmul.f32 %v1447, 1.442695
    %v1465 = vpow.pop %v1464
    %v1466 = vmul.f32 %v1448, 1.442695
    %v1467 = vpow.pop %v1466
    %v1468 = vmul.f32 %v1449, 1.442695
    %v1469 = vpow.pop %v1468
    %v1470 = vmul.f32 %v1450, 1.442695
    %v1471 = vpow.pop %v1470
    %v1472 = vmul.f32 %v1451, 1.442695
    %v1473 = vpow.pop %v1472
    %v1474 = vmul.f32 %v1452, 1.442695
    %v1475 = vpow.pop %v1474
    %v1476 = vmul.f32 %v1453, 1.442695
    %v1477 = vpow.pop %v1476
    %v1478 = vmul.f32 %v1454, 1.442695
    %v1479 = vpow.pop %v1478
    %v1480 = vmul.f32 %v1455, 1.442695
    %v1481 = vpow.pop %v1480
    %v1482 = vmul.f32 %v1456, 1.442695
    %v1483 = vpow.pop %v1482
    %v1484 = vmul.f32 %v1457, 1.442695
    %v1485 = vpow.pop %v1484
    %v1486 = vmul.f32 %v1458, 1.442695
    %v1487 = vpow.pop %v1486
    %v1488 = vmul.f32 %v1459, 1.442695
    %v1489 = vpow.pop %v1488
    %v1490 = vmul.f32 %v1460, 1.442695
    %v1491 = vpow.pop %v1490
    %v1492 = vmul.f32 %v1461, 1.442695
    %v1493 = vpow.pop %v1492
    %v1494 = vld [vmem:[#allocation2] sm:$0xff]
    %v1495 = vld [vmem:[#allocation2 + $0x8] sm:$0xff]
    %v1496 = vld [vmem:[#allocation2 + $0x10] sm:$0xff]
    %v1497 = vld [vmem:[#allocation2 + $0x18] sm:$0xff]
    %v1498 = vld [vmem:[#allocation2 + $0x20] sm:$0xff]
    %v1499 = vld [vmem:[#allocation2 + $0x28] sm:$0xff]
    %v1500 = vld [vmem:[#allocation2 + $0x30] sm:$0xff]
    %v1501 = vld [vmem:[#allocation2 + $0x38] sm:$0xff]
    %v1502 = vld [vmem:[#allocation2 + $0x40] sm:$0xff]
    %v1503 = vld [vmem:[#allocation2 + $0x48] sm:$0xff]
    %v1504 = vld [vmem:[#allocation2 + $0x50] sm:$0xff]
    %v1505 = vld [vmem:[#allocation2 + $0x58] sm:$0xff]
    %v1506 = vld [vmem:[#allocation2 + $0x60] sm:$0xff]
    %v1507 = vld [vmem:[#allocation2 + $0x68] sm:$0xff]
    %v1508 = vld [vmem:[#allocation2 + $0x70] sm:$0xff]
    %v1509 = vld [vmem:[#allocation2 + $0x78] sm:$0xff]
    %v1510 = vmul.f32 %v1463, %v1494
    %v1511 = vmul.f32 %v1465, %v1495
    %v1512 = vmul.f32 %v1467, %v1496
    %v1513 = vmul.f32 %v1469, %v1497
    %v1514 = vmul.f32 %v1471, %v1498
    %v1515 = vmul.f32 %v1473, %v1499
    %v1516 = vmul.f32 %v1475, %v1500
    %v1517 = vmul.f32 %v1477, %v1501
    %v1518 = vmul.f32 %v1479, %v1502
    %v1519 = vmul.f32 %v1481, %v1503
    %v1520 = vmul.f32 %v1483, %v1504
    %v1521 = vmul.f32 %v1485, %v1505
    %v1522 = vmul.f32 %v1487, %v1506
    %v1523 = vmul.f32 %v1489, %v1507
    %v1524 = vmul.f32 %v1491, %v1508
    %v1525 = vmul.f32 %v1493, %v1509
    %v1526 = vld [vmem:[%s7] sm:$0xff]
    %v1527 = vld [vmem:[%s7 + $0x8] sm:$0xff]
    %v1528 = vld [vmem:[%s7 + $0x10] sm:$0xff]
    %v1529 = vld [vmem:[%s7 + $0x18] sm:$0xff]
    %v1530 = vld [vmem:[%s7 + $0x20] sm:$0xff]
    %v1531 = vld [vmem:[%s7 + $0x28] sm:$0xff]
    %v1532 = vld [vmem:[%s7 + $0x30] sm:$0xff]
    %v1533 = vld [vmem:[%s7 + $0x38] sm:$0xff]
    %v1534 = vld [vmem:[%s7 + $0x40] sm:$0xff]
    %v1535 = vld [vmem:[%s7 + $0x48] sm:$0xff]
    %v1536 = vld [vmem:[%s7 + $0x50] sm:$0xff]
    %v1537 = vld [vmem:[%s7 + $0x58] sm:$0xff]
    %v1538 = vld [vmem:[%s7 + $0x60] sm:$0xff]
    %v1539 = vld [vmem:[%s7 + $0x68] sm:$0xff]
    %v1540 = vld [vmem:[%s7 + $0x70] sm:$0xff]
    %v1541 = vld [vmem:[%s7 + $0x78] sm:$0xff]
    %v1542 = vld [vmem:[%s7 + $0x80] sm:$0xff]
    %v1543 = vld [vmem:[%s7 + $0x88] sm:$0xff]
    %v1544 = vld [vmem:[%s7 + $0x90] sm:$0xff]
    %v1545 = vld [vmem:[%s7 + $0x98] sm:$0xff]
    %v1546 = vld [vmem:[%s7 + $0xa0] sm:$0xff]
    %v1547 = vld [vmem:[%s7 + $0xa8] sm:$0xff]
    %v1548 = vld [vmem:[%s7 + $0xb0] sm:$0xff]
    %v1549 = vld [vmem:[%s7 + $0xb8] sm:$0xff]
    %v1550 = vld [vmem:[%s7 + $0xc0] sm:$0xff]
    %v1551 = vld [vmem:[%s7 + $0xc8] sm:$0xff]
    %v1552 = vld [vmem:[%s7 + $0xd0] sm:$0xff]
    %v1553 = vld [vmem:[%s7 + $0xd8] sm:$0xff]
    %v1554 = vld [vmem:[%s7 + $0xe0] sm:$0xff]
    %v1555 = vld [vmem:[%s7 + $0xe8] sm:$0xff]
    %v1556 = vld [vmem:[%s7 + $0xf0] sm:$0xff]
    %v1557 = vld [vmem:[%s7 + $0xf8] sm:$0xff]
    %v1558 = vld [vmem:[%s7 + $0x100] sm:$0xff]
    %v1559 = vld [vmem:[%s7 + $0x108] sm:$0xff]
    %v1560 = vld [vmem:[%s7 + $0x110] sm:$0xff]
    %v1561 = vld [vmem:[%s7 + $0x118] sm:$0xff]
    %v1562 = vld [vmem:[%s7 + $0x120] sm:$0xff]
    %v1563 = vld [vmem:[%s7 + $0x128] sm:$0xff]
    %v1564 = vld [vmem:[%s7 + $0x130] sm:$0xff]
    %v1565 = vld [vmem:[%s7 + $0x138] sm:$0xff]
    %v1566 = vld [vmem:[%s7 + $0x140] sm:$0xff]
    %v1567 = vld [vmem:[%s7 + $0x148] sm:$0xff]
    %v1568 = vld [vmem:[%s7 + $0x150] sm:$0xff]
    %v1569 = vld [vmem:[%s7 + $0x158] sm:$0xff]
    %v1570 = vld [vmem:[%s7 + $0x160] sm:$0xff]
    %v1571 = vld [vmem:[%s7 + $0x168] sm:$0xff]
    %v1572 = vld [vmem:[%s7 + $0x170] sm:$0xff]
    %v1573 = vld [vmem:[%s7 + $0x178] sm:$0xff]
    %v1574 = vld [vmem:[%s7 + $0x180] sm:$0xff]
    %v1575 = vld [vmem:[%s7 + $0x188] sm:$0xff]
    %v1576 = vld [vmem:[%s7 + $0x190] sm:$0xff]
    %v1577 = vld [vmem:[%s7 + $0x198] sm:$0xff]
    %v1578 = vld [vmem:[%s7 + $0x1a0] sm:$0xff]
    %v1579 = vld [vmem:[%s7 + $0x1a8] sm:$0xff]
    %v1580 = vld [vmem:[%s7 + $0x1b0] sm:$0xff]
    %v1581 = vld [vmem:[%s7 + $0x1b8] sm:$0xff]
    %v1582 = vld [vmem:[%s7 + $0x1c0] sm:$0xff]
    %v1583 = vld [vmem:[%s7 + $0x1c8] sm:$0xff]
    %v1584 = vld [vmem:[%s7 + $0x1d0] sm:$0xff]
    %v1585 = vld [vmem:[%s7 + $0x1d8] sm:$0xff]
    %v1586 = vld [vmem:[%s7 + $0x1e0] sm:$0xff]
    %v1587 = vld [vmem:[%s7 + $0x1e8] sm:$0xff]
    %v1588 = vld [vmem:[%s7 + $0x1f0] sm:$0xff]
    %v1589 = vld [vmem:[%s7 + $0x1f8] sm:$0xff]
    %1590 = vmatprep.subr.mxu0 0.0
    %1591 = vmatpush1.msra.mxu0 %v1541
    %1592 = vmatprep.subr.mxu0 0.0
    %1593 = vmatpush1.msra.mxu0 %v1540
    %1594 = vmatprep.subr.mxu0 0.0
    %1595 = vmatpush1.msra.mxu0 %v1539
    %1596 = vmatprep.subr.mxu0 0.0
    %1597 = vmatpush1.msra.mxu0 %v1538
    %1598 = vmatprep.subr.mxu0 0.0
    %1599 = vmatpush1.msra.mxu0 %v1537
    %1600 = vmatprep.subr.mxu0 0.0
    %1601 = vmatpush1.msra.mxu0 %v1536
    %1602 = vmatprep.subr.mxu0 0.0
    %1603 = vmatpush1.msra.mxu0 %v1535
    %1604 = vmatprep.subr.mxu0 0.0
    %1605 = vmatpush1.msra.mxu0 %v1534
    %1606 = vmatprep.subr.mxu0 0.0
    %1607 = vmatpush1.msra.mxu0 %v1533
    %1608 = vmatprep.subr.mxu0 0.0
    %1609 = vmatpush1.msra.mxu0 %v1532
    %1610 = vmatprep.subr.mxu0 0.0
    %1611 = vmatpush1.msra.mxu0 %v1531
    %1612 = vmatprep.subr.mxu0 0.0
    %1613 = vmatpush1.msra.mxu0 %v1530
    %1614 = vmatprep.subr.mxu0 0.0
    %1615 = vmatpush1.msra.mxu0 %v1529
    %1616 = vmatprep.subr.mxu0 0.0
    %1617 = vmatpush1.msra.mxu0 %v1528
    %1618 = vmatprep.subr.mxu0 0.0
    %1619 = vmatpush1.msra.mxu0 %v1527
    %1620 = vmatprep.subr.mxu0 0.0
    %1621 = vmatpush1.msra.mxu0 %v1526
    %1622 = vmatprep.subr.mxu0 0.0
    %1623 = vmatpush2.msra.mxu0 %v1557
    %1624 = vmatprep.subr.mxu0 0.0
    %1625 = vmatpush2.msra.mxu0 %v1556
    %1626 = vmatprep.subr.mxu0 0.0
    %1627 = vmatpush2.msra.mxu0 %v1555
    %1628 = vmatprep.subr.mxu0 0.0
    %1629 = vmatpush2.msra.mxu0 %v1554
    %1630 = vmatprep.subr.mxu0 0.0
    %1631 = vmatpush2.msra.mxu0 %v1553
    %1632 = vmatprep.subr.mxu0 0.0
    %1633 = vmatpush2.msra.mxu0 %v1552
    %1634 = vmatprep.subr.mxu0 0.0
    %1635 = vmatpush2.msra.mxu0 %v1551
    %1636 = vmatprep.subr.mxu0 0.0
    %1637 = vmatpush2.msra.mxu0 %v1550
    %1638 = vmatprep.subr.mxu0 0.0
    %1639 = vmatpush2.msra.mxu0 %v1549
    %1640 = vmatprep.subr.mxu0 0.0
    %1641 = vmatpush2.msra.mxu0 %v1548
    %1642 = vmatprep.subr.mxu0 0.0
    %1643 = vmatpush2.msra.mxu0 %v1547
    %1644 = vmatprep.subr.mxu0 0.0
    %1645 = vmatpush2.msra.mxu0 %v1546
    %1646 = vmatprep.subr.mxu0 0.0
    %1647 = vmatpush2.msra.mxu0 %v1545
    %1648 = vmatprep.subr.mxu0 0.0
    %1649 = vmatpush2.msra.mxu0 %v1544
    %1650 = vmatprep.subr.mxu0 0.0
    %1651 = vmatpush2.msra.mxu0 %v1543
    %1652 = vmatprep.subr.mxu0 0.0
    %1653 = vmatpush2.msra.mxu0 %v1542
    %1654 = vmatprep.mubr.f32.mxu0 %v1511
    %1655 = vmatmul.mubr.f32.gmra.mxu0 %v1510
    %v1656 = vpop.f32.mrf.mxu0
    %v1657 = vadd.f32 0.0, %v1656
    %v1658 = vpop.f32.mrf.mxu0
    %1659 = vmatprep.mubr.f32.mxu0 %v1515
    %1660 = vmatmul.mubr.f32.gmra.mxu0 %v1514
    %v1661 = vpop.f32.mrf.mxu0
    %v1662 = vadd.f32 0.0, %v1661
    %v1663 = vpop.f32.mrf.mxu0
    %1664 = vmatprep.mubr.f32.mxu0 %v1519
    %1665 = vmatmul.mubr.f32.gmra.mxu0 %v1518
    %v1666 = vpop.f32.mrf.mxu0
    %v1667 = vadd.f32 0.0, %v1666
    %v1668 = vpop.f32.mrf.mxu0
    %1669 = vmatprep.mubr.f32.mxu0 %v1523
    %1670 = vmatmul.mubr.f32.gmra.mxu0 %v1522
    %v1671 = vpop.f32.mrf.mxu0
    %v1672 = vadd.f32 0.0, %v1671
    %v1673 = vpop.f32.mrf.mxu0
    %1674 = vdwg.mxu0
    %1675 = vmatprep.subr.mxu0 0.0
    %1676 = vmatpush1.msra.mxu0 %v1573
    %1677 = vmatprep.subr.mxu0 0.0
    %1678 = vmatpush1.msra.mxu0 %v1572
    %1679 = vmatprep.subr.mxu0 0.0
    %1680 = vmatpush1.msra.mxu0 %v1571
    %1681 = vmatprep.subr.mxu0 0.0
    %1682 = vmatpush1.msra.mxu0 %v1570
    %1683 = vmatprep.subr.mxu0 0.0
    %1684 = vmatpush1.msra.mxu0 %v1569
    %1685 = vmatprep.subr.mxu0 0.0
    %1686 = vmatpush1.msra.mxu0 %v1568
    %1687 = vmatprep.subr.mxu0 0.0
    %1688 = vmatpush1.msra.mxu0 %v1567
    %1689 = vmatprep.subr.mxu0 0.0
    %1690 = vmatpush1.msra.mxu0 %v1566
    %1691 = vmatprep.subr.mxu0 0.0
    %1692 = vmatpush1.msra.mxu0 %v1565
    %1693 = vmatprep.subr.mxu0 0.0
    %1694 = vmatpush1.msra.mxu0 %v1564
    %1695 = vmatprep.subr.mxu0 0.0
    %1696 = vmatpush1.msra.mxu0 %v1563
    %1697 = vmatprep.subr.mxu0 0.0
    %1698 = vmatpush1.msra.mxu0 %v1562
    %1699 = vmatprep.subr.mxu0 0.0
    %1700 = vmatpush1.msra.mxu0 %v1561
    %1701 = vmatprep.subr.mxu0 0.0
    %1702 = vmatpush1.msra.mxu0 %v1560
    %1703 = vmatprep.subr.mxu0 0.0
    %1704 = vmatpush1.msra.mxu0 %v1559
    %1705 = vmatprep.subr.mxu0 0.0
    %1706 = vmatpush1.msra.mxu0 %v1558
    %1707 = vmatprep.subr.mxu0 0.0
    %1708 = vmatpush2.msra.mxu0 %v1589
    %1709 = vmatprep.subr.mxu0 0.0
    %1710 = vmatpush2.msra.mxu0 %v1588
    %1711 = vmatprep.subr.mxu0 0.0
    %1712 = vmatpush2.msra.mxu0 %v1587
    %1713 = vmatprep.subr.mxu0 0.0
    %1714 = vmatpush2.msra.mxu0 %v1586
    %1715 = vmatprep.subr.mxu0 0.0
    %1716 = vmatpush2.msra.mxu0 %v1585
    %1717 = vmatprep.subr.mxu0 0.0
    %1718 = vmatpush2.msra.mxu0 %v1584
    %1719 = vmatprep.subr.mxu0 0.0
    %1720 = vmatpush2.msra.mxu0 %v1583
    %1721 = vmatprep.subr.mxu0 0.0
    %1722 = vmatpush2.msra.mxu0 %v1582
    %1723 = vmatprep.subr.mxu0 0.0
    %1724 = vmatpush2.msra.mxu0 %v1581
    %1725 = vmatprep.subr.mxu0 0.0
    %1726 = vmatpush2.msra.mxu0 %v1580
    %1727 = vmatprep.subr.mxu0 0.0
    %1728 = vmatpush2.msra.mxu0 %v1579
    %1729 = vmatprep.subr.mxu0 0.0
    %1730 = vmatpush2.msra.mxu0 %v1578
    %1731 = vmatprep.subr.mxu0 0.0
    %1732 = vmatpush2.msra.mxu0 %v1577
    %1733 = vmatprep.subr.mxu0 0.0
    %1734 = vmatpush2.msra.mxu0 %v1576
    %1735 = vmatprep.subr.mxu0 0.0
    %1736 = vmatpush2.msra.mxu0 %v1575
    %1737 = vmatprep.subr.mxu0 0.0
    %1738 = vmatpush2.msra.mxu0 %v1574
    %1739 = vmatprep.mubr.f32.mxu0 %v1513
    %1740 = vmatmul.mubr.f32.gmra.mxu0 %v1512
    %v1741 = vpop.f32.mrf.mxu0
    %v1742 = vadd.f32 %v1657, %v1741
    %v1743 = vpop.f32.mrf.mxu0
    %1744 = vmatprep.mubr.f32.mxu0 %v1517
    %1745 = vmatmul.mubr.f32.gmra.mxu0 %v1516
    %v1746 = vpop.f32.mrf.mxu0
    %v1747 = vadd.f32 %v1662, %v1746
    %v1748 = vpop.f32.mrf.mxu0
    %1749 = vmatprep.mubr.f32.mxu0 %v1521
    %1750 = vmatmul.mubr.f32.gmra.mxu0 %v1520
    %v1751 = vpop.f32.mrf.mxu0
    %v1752 = vadd.f32 %v1667, %v1751
    %v1753 = vpop.f32.mrf.mxu0
    %1754 = vmatprep.mubr.f32.mxu0 %v1525
    %1755 = vmatmul.mubr.f32.gmra.mxu0 %v1524
    %v1756 = vpop.f32.mrf.mxu0
    %v1757 = vadd.f32 %v1672, %v1756
    %v1758 = vpop.f32.mrf.mxu0
    %1759 = vdwg.mxu0
    %v1760 = vmax.f32 %v1742, 1e-30
    %v1761 = vmax.f32 %v1747, 1e-30
    %v1762 = vmax.f32 %v1752, 1e-30
    %v1763 = vmax.f32 %v1757, 1e-30
    %v1764 = vrcp.pop %v1760
    %v1765 = vrcp.pop %v1761
    %v1766 = vrcp.pop %v1762
    %v1767 = vrcp.pop %v1763
    %v1768 = vmul.f32 %v1760, %v1764
    %v1769 = vmul.f32 %v1761, %v1765
    %v1770 = vmul.f32 %v1762, %v1766
    %v1771 = vmul.f32 %v1763, %v1767
    %v1772 = vsub.f32 2.0, %v1768
    %v1773 = vsub.f32 2.0, %v1769
    %v1774 = vsub.f32 2.0, %v1770
    %v1775 = vsub.f32 2.0, %v1771
    %v1776 = vmul.f32 %v1764, %v1772
    %v1777 = vmul.f32 %v1765, %v1773
    %v1778 = vmul.f32 %v1766, %v1774
    %v1779 = vmul.f32 %v1767, %v1775
    %v1780 = vld [vmem:[#allocation5] sm:$0xff]
    %v1781 = vld [vmem:[#allocation5 + $0x8] sm:$0xff]
    %v1782 = vld [vmem:[#allocation5 + $0x10] sm:$0xff]
    %v1783 = vld [vmem:[#allocation5 + $0x18] sm:$0xff]
    %v1784 = vld [vmem:[#allocation5 + $0x20] sm:$0xff]
    %v1785 = vld [vmem:[#allocation5 + $0x28] sm:$0xff]
    %v1786 = vld [vmem:[#allocation5 + $0x30] sm:$0xff]
    %v1787 = vld [vmem:[#allocation5 + $0x38] sm:$0xff]
    %v1788 = vld [vmem:[#allocation5 + $0x40] sm:$0xff]
    %v1789 = vld [vmem:[#allocation5 + $0x48] sm:$0xff]
    %v1790 = vld [vmem:[#allocation5 + $0x50] sm:$0xff]
    %v1791 = vld [vmem:[#allocation5 + $0x58] sm:$0xff]
    %v1792 = vld [vmem:[#allocation5 + $0x60] sm:$0xff]
    %v1793 = vld [vmem:[#allocation5 + $0x68] sm:$0xff]
    %v1794 = vld [vmem:[#allocation5 + $0x70] sm:$0xff]
    %v1795 = vld [vmem:[#allocation5 + $0x78] sm:$0xff]
    %v1797 = vsel %vm478, %v1776, 0
    %v1800 = vsel %vm478, %v1777, 0
    %v1803 = vsel %vm478, %v1778, 0
    %v1806 = vsel %vm478, %v1779, 0
    %1808 = vmatprep.subr.mxu0 0.0
    %1809 = vmatpush1.msra.mxu0 0.0
    %1810 = vmatprep.subr.mxu0 0.0
    %1811 = vmatpush1.msra.mxu0 0.0
    %1812 = vmatprep.subr.mxu0 0.0
    %1813 = vmatpush1.msra.mxu0 0.0
    %1814 = vmatprep.subr.mxu0 0.0
    %1815 = vmatpush1.msra.mxu0 0.0
    %1816 = vmatprep.subr.mxu0 0.0
    %1817 = vmatpush1.msra.mxu0 0.0
    %1818 = vmatprep.subr.mxu0 0.0
    %1819 = vmatpush1.msra.mxu0 0.0
    %1820 = vmatprep.subr.mxu0 0.0
    %1821 = vmatpush1.msra.mxu0 0.0
    %1822 = vmatprep.subr.mxu0 0.0
    %1823 = vmatpush1.msra.mxu0 0.0
    %1824 = vmatprep.subr.mxu0 0.0
    %1825 = vmatpush1.msra.mxu0 0.0
    %1826 = vmatprep.subr.mxu0 0.0
    %1827 = vmatpush1.msra.mxu0 0.0
    %1828 = vmatprep.subr.mxu0 0.0
    %1829 = vmatpush1.msra.mxu0 0.0
    %1830 = vmatprep.subr.mxu0 0.0
    %1831 = vmatpush1.msra.mxu0 0.0
    %1832 = vmatprep.subr.mxu0 %v1793
    %1833 = vmatpush1.msra.mxu0 %v1792
    %1834 = vmatprep.subr.mxu0 %v1789
    %1835 = vmatpush1.msra.mxu0 %v1788
    %1836 = vmatprep.subr.mxu0 %v1785
    %1837 = vmatpush1.msra.mxu0 %v1784
    %1838 = vmatprep.subr.mxu0 %v1781
    %1839 = vmatpush1.msra.mxu0 %v1780
    %1840 = vmatprep.subr.mxu0 0.0
    %1841 = vmatpush2.msra.mxu0 0.0
    %1842 = vmatprep.subr.mxu0 0.0
    %1843 = vmatpush2.msra.mxu0 0.0
    %1844 = vmatprep.subr.mxu0 0.0
    %1845 = vmatpush2.msra.mxu0 0.0
    %1846 = vmatprep.subr.mxu0 0.0
    %1847 = vmatpush2.msra.mxu0 0.0
    %1848 = vmatprep.subr.mxu0 0.0
    %1849 = vmatpush2.msra.mxu0 0.0
    %1850 = vmatprep.subr.mxu0 0.0
    %1851 = vmatpush2.msra.mxu0 0.0
    %1852 = vmatprep.subr.mxu0 0.0
    %1853 = vmatpush2.msra.mxu0 0.0
    %1854 = vmatprep.subr.mxu0 0.0
    %1855 = vmatpush2.msra.mxu0 0.0
    %1856 = vmatprep.subr.mxu0 0.0
    %1857 = vmatpush2.msra.mxu0 0.0
    %1858 = vmatprep.subr.mxu0 0.0
    %1859 = vmatpush2.msra.mxu0 0.0
    %1860 = vmatprep.subr.mxu0 0.0
    %1861 = vmatpush2.msra.mxu0 0.0
    %1862 = vmatprep.subr.mxu0 0.0
    %1863 = vmatpush2.msra.mxu0 0.0
    %1864 = vmatprep.subr.mxu0 0.0
    %1865 = vmatpush2.msra.mxu0 0.0
    %1866 = vmatprep.subr.mxu0 0.0
    %1867 = vmatpush2.msra.mxu0 0.0
    %1868 = vmatprep.subr.mxu0 0.0
    %1869 = vmatpush2.msra.mxu0 0.0
    %1870 = vmatprep.subr.mxu0 0.0
    %1871 = vmatpush2.msra.mxu0 0.0
    %1872 = vmatprep.mubr.f32.mxu0 0.0
    %1873 = vmatmul.mubr.f32.gmra.mxu0 %v1797
    %v1874 = vpop.f32.mrf.mxu0
    %v1875 = vadd.f32 0.0, %v1874
    %v1876 = vpop.f32.mrf.mxu0
    %v1877 = vadd.f32 0.0, %v1876
    %1878 = vmatprep.mubr.f32.mxu0 0.0
    %1879 = vmatmul.mubr.f32.gmra.mxu0 %v1800
    %v1880 = vpop.f32.mrf.mxu0
    %v1881 = vadd.f32 0.0, %v1880
    %v1882 = vpop.f32.mrf.mxu0
    %v1883 = vadd.f32 0.0, %v1882
    %1884 = vmatprep.mubr.f32.mxu0 0.0
    %1885 = vmatmul.mubr.f32.gmra.mxu0 %v1803
    %v1886 = vpop.f32.mrf.mxu0
    %v1887 = vadd.f32 0.0, %v1886
    %v1888 = vpop.f32.mrf.mxu0
    %v1889 = vadd.f32 0.0, %v1888
    %1890 = vmatprep.mubr.f32.mxu0 0.0
    %1891 = vmatmul.mubr.f32.gmra.mxu0 %v1806
    %v1892 = vpop.f32.mrf.mxu0
    %v1893 = vadd.f32 0.0, %v1892
    %v1894 = vpop.f32.mrf.mxu0
    %v1895 = vadd.f32 0.0, %v1894
    %1896 = vdwg.mxu0
    %1897 = vmatprep.subr.mxu0 0.0
    %1898 = vmatpush1.msra.mxu0 0.0
    %1899 = vmatprep.subr.mxu0 0.0
    %1900 = vmatpush1.msra.mxu0 0.0
    %1901 = vmatprep.subr.mxu0 0.0
    %1902 = vmatpush1.msra.mxu0 0.0
    %1903 = vmatprep.subr.mxu0 0.0
    %1904 = vmatpush1.msra.mxu0 0.0
    %1905 = vmatprep.subr.mxu0 0.0
    %1906 = vmatpush1.msra.mxu0 0.0
    %1907 = vmatprep.subr.mxu0 0.0
    %1908 = vmatpush1.msra.mxu0 0.0
    %1909 = vmatprep.subr.mxu0 0.0
    %1910 = vmatpush1.msra.mxu0 0.0
    %1911 = vmatprep.subr.mxu0 0.0
    %1912 = vmatpush1.msra.mxu0 0.0
    %1913 = vmatprep.subr.mxu0 0.0
    %1914 = vmatpush1.msra.mxu0 0.0
    %1915 = vmatprep.subr.mxu0 0.0
    %1916 = vmatpush1.msra.mxu0 0.0
    %1917 = vmatprep.subr.mxu0 0.0
    %1918 = vmatpush1.msra.mxu0 0.0
    %1919 = vmatprep.subr.mxu0 0.0
    %1920 = vmatpush1.msra.mxu0 0.0
    %1921 = vmatprep.subr.mxu0 %v1795
    %1922 = vmatpush1.msra.mxu0 %v1794
    %1923 = vmatprep.subr.mxu0 %v1791
    %1924 = vmatpush1.msra.mxu0 %v1790
    %1925 = vmatprep.subr.mxu0 %v1787
    %1926 = vmatpush1.msra.mxu0 %v1786
    %1927 = vmatprep.subr.mxu0 %v1783
    %1928 = vmatpush1.msra.mxu0 %v1782
    %1929 = vmatprep.subr.mxu0 0.0
    %1930 = vmatpush2.msra.mxu0 0.0
    %1931 = vmatprep.subr.mxu0 0.0
    %1932 = vmatpush2.msra.mxu0 0.0
    %1933 = vmatprep.subr.mxu0 0.0
    %1934 = vmatpush2.msra.mxu0 0.0
    %1935 = vmatprep.subr.mxu0 0.0
    %1936 = vmatpush2.msra.mxu0 0.0
    %1937 = vmatprep.subr.mxu0 0.0
    %1938 = vmatpush2.msra.mxu0 0.0
    %1939 = vmatprep.subr.mxu0 0.0
    %1940 = vmatpush2.msra.mxu0 0.0
    %1941 = vmatprep.subr.mxu0 0.0
    %1942 = vmatpush2.msra.mxu0 0.0
    %1943 = vmatprep.subr.mxu0 0.0
    %1944 = vmatpush2.msra.mxu0 0.0
    %1945 = vmatprep.subr.mxu0 0.0
    %1946 = vmatpush2.msra.mxu0 0.0
    %1947 = vmatprep.subr.mxu0 0.0
    %1948 = vmatpush2.msra.mxu0 0.0
    %1949 = vmatprep.subr.mxu0 0.0
    %1950 = vmatpush2.msra.mxu0 0.0
    %1951 = vmatprep.subr.mxu0 0.0
    %1952 = vmatpush2.msra.mxu0 0.0
    %1953 = vmatprep.subr.mxu0 0.0
    %1954 = vmatpush2.msra.mxu0 0.0
    %1955 = vmatprep.subr.mxu0 0.0
    %1956 = vmatpush2.msra.mxu0 0.0
    %1957 = vmatprep.subr.mxu0 0.0
    %1958 = vmatpush2.msra.mxu0 0.0
    %1959 = vmatprep.subr.mxu0 0.0
    %1960 = vmatpush2.msra.mxu0 0.0
    %1961 = vmatprep.mubr.f32.mxu0 0.0
    %1962 = vmatmul.mubr.f32.gmra.mxu0 %v1797
    %v1963 = vpop.f32.mrf.mxu0
    %v1964 = vadd.f32 0.0, %v1963
    %v1965 = vpop.f32.mrf.mxu0
    %v1966 = vadd.f32 0.0, %v1965
    %1967 = vmatprep.mubr.f32.mxu0 0.0
    %1968 = vmatmul.mubr.f32.gmra.mxu0 %v1800
    %v1969 = vpop.f32.mrf.mxu0
    %v1970 = vadd.f32 0.0, %v1969
    %v1971 = vpop.f32.mrf.mxu0
    %v1972 = vadd.f32 0.0, %v1971
    %1973 = vmatprep.mubr.f32.mxu0 0.0
    %1974 = vmatmul.mubr.f32.gmra.mxu0 %v1803
    %v1975 = vpop.f32.mrf.mxu0
    %v1976 = vadd.f32 0.0, %v1975
    %v1977 = vpop.f32.mrf.mxu0
    %v1978 = vadd.f32 0.0, %v1977
    %1979 = vmatprep.mubr.f32.mxu0 0.0
    %1980 = vmatmul.mubr.f32.gmra.mxu0 %v1806
    %v1981 = vpop.f32.mrf.mxu0
    %v1982 = vadd.f32 0.0, %v1981
    %v1983 = vpop.f32.mrf.mxu0
    %v1984 = vadd.f32 0.0, %v1983
    %1985 = vdwg.mxu0
    %v1986 = vmul.f32 %v1510, %v1875
    %v1987 = vmul.f32 %v1511, %v1877
    %v1988 = vmul.f32 %v1512, %v1964
    %v1989 = vmul.f32 %v1513, %v1966
    %v1990 = vmul.f32 %v1514, %v1881
    %v1991 = vmul.f32 %v1515, %v1883
    %v1992 = vmul.f32 %v1516, %v1970
    %v1993 = vmul.f32 %v1517, %v1972
    %v1994 = vmul.f32 %v1518, %v1887
    %v1995 = vmul.f32 %v1519, %v1889
    %v1996 = vmul.f32 %v1520, %v1976
    %v1997 = vmul.f32 %v1521, %v1978
    %v1998 = vmul.f32 %v1522, %v1893
    %v1999 = vmul.f32 %v1523, %v1895
    %v2000 = vmul.f32 %v1524, %v1982
    %v2001 = vmul.f32 %v1525, %v1984
    %2002 = vmatprep.subr.mxu0 0.0
    %2003 = vmatpush1.msra.mxu0 %v1199
    %2004 = vmatprep.subr.mxu0 0.0
    %2005 = vmatpush1.msra.mxu0 %v1198
    %2006 = vmatprep.subr.mxu0 0.0
    %2007 = vmatpush1.msra.mxu0 %v1197
    %2008 = vmatprep.subr.mxu0 0.0
    %2009 = vmatpush1.msra.mxu0 %v1196
    %2010 = vmatprep.subr.mxu0 0.0
    %2011 = vmatpush1.msra.mxu0 %v1195
    %2012 = vmatprep.subr.mxu0 0.0
    %2013 = vmatpush1.msra.mxu0 %v1194
    %2014 = vmatprep.subr.mxu0 0.0
    %2015 = vmatpush1.msra.mxu0 %v1193
    %2016 = vmatprep.subr.mxu0 0.0
    %2017 = vmatpush1.msra.mxu0 %v1192
    %2018 = vmatprep.subr.mxu0 0.0
    %2019 = vmatpush1.msra.mxu0 %v1191
    %2020 = vmatprep.subr.mxu0 0.0
    %2021 = vmatpush1.msra.mxu0 %v1190
    %2022 = vmatprep.subr.mxu0 0.0
    %2023 = vmatpush1.msra.mxu0 %v1189
    %2024 = vmatprep.subr.mxu0 0.0
    %2025 = vmatpush1.msra.mxu0 %v1188
    %2026 = vmatprep.subr.mxu0 0.0
    %2027 = vmatpush1.msra.mxu0 %v1187
    %2028 = vmatprep.subr.mxu0 0.0
    %2029 = vmatpush1.msra.mxu0 %v1186
    %2030 = vmatprep.subr.mxu0 0.0
    %2031 = vmatpush1.msra.mxu0 %v1185
    %2032 = vmatprep.subr.mxu0 0.0
    %2033 = vmatpush1.msra.mxu0 %v1184
    %2034 = vmatprep.subr.mxu0 0.0
    %2035 = vmatpush2.msra.mxu0 %v1215
    %2036 = vmatprep.subr.mxu0 0.0
    %2037 = vmatpush2.msra.mxu0 %v1214
    %2038 = vmatprep.subr.mxu0 0.0
    %2039 = vmatpush2.msra.mxu0 %v1213
    %2040 = vmatprep.subr.mxu0 0.0
    %2041 = vmatpush2.msra.mxu0 %v1212
    %2042 = vmatprep.subr.mxu0 0.0
    %2043 = vmatpush2.msra.mxu0 %v1211
    %2044 = vmatprep.subr.mxu0 0.0
    %2045 = vmatpush2.msra.mxu0 %v1210
    %2046 = vmatprep.subr.mxu0 0.0
    %2047 = vmatpush2.msra.mxu0 %v1209
    %2048 = vmatprep.subr.mxu0 0.0
    %2049 = vmatpush2.msra.mxu0 %v1208
    %2050 = vmatprep.subr.mxu0 0.0
    %2051 = vmatpush2.msra.mxu0 %v1207
    %2052 = vmatprep.subr.mxu0 0.0
    %2053 = vmatpush2.msra.mxu0 %v1206
    %2054 = vmatprep.subr.mxu0 0.0
    %2055 = vmatpush2.msra.mxu0 %v1205
    %2056 = vmatprep.subr.mxu0 0.0
    %2057 = vmatpush2.msra.mxu0 %v1204
    %2058 = vmatprep.subr.mxu0 0.0
    %2059 = vmatpush2.msra.mxu0 %v1203
    %2060 = vmatprep.subr.mxu0 0.0
    %2061 = vmatpush2.msra.mxu0 %v1202
    %2062 = vmatprep.subr.mxu0 0.0
    %2063 = vmatpush2.msra.mxu0 %v1201
    %2064 = vmatprep.subr.mxu0 0.0
    %2065 = vmatpush2.msra.mxu0 %v1200
    %2066 = vmatprep.mubr.f32.mxu0 %v1987
    %2067 = vmatmul.mubr.f32.gmra.mxu0 %v1986
    %v2068 = vpop.f32.mrf.mxu0
    %v2069 = vadd.f32 0.0, %v2068
    %v2070 = vpop.f32.mrf.mxu0
    %2071 = vmatprep.mubr.f32.mxu0 %v1991
    %2072 = vmatmul.mubr.f32.gmra.mxu0 %v1990
    %v2073 = vpop.f32.mrf.mxu0
    %v2074 = vadd.f32 0.0, %v2073
    %v2075 = vpop.f32.mrf.mxu0
    %2076 = vmatprep.mubr.f32.mxu0 %v1995
    %2077 = vmatmul.mubr.f32.gmra.mxu0 %v1994
    %v2078 = vpop.f32.mrf.mxu0
    %v2079 = vadd.f32 0.0, %v2078
    %v2080 = vpop.f32.mrf.mxu0
    %2081 = vmatprep.mubr.f32.mxu0 %v1999
    %2082 = vmatmul.mubr.f32.gmra.mxu0 %v1998
    %v2083 = vpop.f32.mrf.mxu0
    %v2084 = vadd.f32 0.0, %v2083
    %v2085 = vpop.f32.mrf.mxu0
    %2086 = vdwg.mxu0
    %2087 = vmatprep.subr.mxu0 0.0
    %2088 = vmatpush1.msra.mxu0 %v1231
    %2089 = vmatprep.subr.mxu0 0.0
    %2090 = vmatpush1.msra.mxu0 %v1230
    %2091 = vmatprep.subr.mxu0 0.0
    %2092 = vmatpush1.msra.mxu0 %v1229
    %2093 = vmatprep.subr.mxu0 0.0
    %2094 = vmatpush1.msra.mxu0 %v1228
    %2095 = vmatprep.subr.mxu0 0.0
    %2096 = vmatpush1.msra.mxu0 %v1227
    %2097 = vmatprep.subr.mxu0 0.0
    %2098 = vmatpush1.msra.mxu0 %v1226
    %2099 = vmatprep.subr.mxu0 0.0
    %2100 = vmatpush1.msra.mxu0 %v1225
    %2101 = vmatprep.subr.mxu0 0.0
    %2102 = vmatpush1.msra.mxu0 %v1224
    %2103 = vmatprep.subr.mxu0 0.0
    %2104 = vmatpush1.msra.mxu0 %v1223
    %2105 = vmatprep.subr.mxu0 0.0
    %2106 = vmatpush1.msra.mxu0 %v1222
    %2107 = vmatprep.subr.mxu0 0.0
    %2108 = vmatpush1.msra.mxu0 %v1221
    %2109 = vmatprep.subr.mxu0 0.0
    %2110 = vmatpush1.msra.mxu0 %v1220
    %2111 = vmatprep.subr.mxu0 0.0
    %2112 = vmatpush1.msra.mxu0 %v1219
    %2113 = vmatprep.subr.mxu0 0.0
    %2114 = vmatpush1.msra.mxu0 %v1218
    %2115 = vmatprep.subr.mxu0 0.0
    %2116 = vmatpush1.msra.mxu0 %v1217
    %2117 = vmatprep.subr.mxu0 0.0
    %2118 = vmatpush1.msra.mxu0 %v1216
    %2119 = vmatprep.subr.mxu0 0.0
    %2120 = vmatpush2.msra.mxu0 %v1247
    %2121 = vmatprep.subr.mxu0 0.0
    %2122 = vmatpush2.msra.mxu0 %v1246
    %2123 = vmatprep.subr.mxu0 0.0
    %2124 = vmatpush2.msra.mxu0 %v1245
    %2125 = vmatprep.subr.mxu0 0.0
    %2126 = vmatpush2.msra.mxu0 %v1244
    %2127 = vmatprep.subr.mxu0 0.0
    %2128 = vmatpush2.msra.mxu0 %v1243
    %2129 = vmatprep.subr.mxu0 0.0
    %2130 = vmatpush2.msra.mxu0 %v1242
    %2131 = vmatprep.subr.mxu0 0.0
    %2132 = vmatpush2.msra.mxu0 %v1241
    %2133 = vmatprep.subr.mxu0 0.0
    %2134 = vmatpush2.msra.mxu0 %v1240
    %2135 = vmatprep.subr.mxu0 0.0
    %2136 = vmatpush2.msra.mxu0 %v1239
    %2137 = vmatprep.subr.mxu0 0.0
    %2138 = vmatpush2.msra.mxu0 %v1238
    %2139 = vmatprep.subr.mxu0 0.0
    %2140 = vmatpush2.msra.mxu0 %v1237
    %2141 = vmatprep.subr.mxu0 0.0
    %2142 = vmatpush2.msra.mxu0 %v1236
    %2143 = vmatprep.subr.mxu0 0.0
    %2144 = vmatpush2.msra.mxu0 %v1235
    %2145 = vmatprep.subr.mxu0 0.0
    %2146 = vmatpush2.msra.mxu0 %v1234
    %2147 = vmatprep.subr.mxu0 0.0
    %2148 = vmatpush2.msra.mxu0 %v1233
    %2149 = vmatprep.subr.mxu0 0.0
    %2150 = vmatpush2.msra.mxu0 %v1232
    %2151 = vmatprep.mubr.f32.mxu0 %v1989
    %2152 = vmatmul.mubr.f32.gmra.mxu0 %v1988
    %v2153 = vpop.f32.mrf.mxu0
    %v2154 = vadd.f32 %v2069, %v2153
    %v2155 = vpop.f32.mrf.mxu0
    %2156 = vmatprep.mubr.f32.mxu0 %v1993
    %2157 = vmatmul.mubr.f32.gmra.mxu0 %v1992
    %v2158 = vpop.f32.mrf.mxu0
    %v2159 = vadd.f32 %v2074, %v2158
    %v2160 = vpop.f32.mrf.mxu0
    %2161 = vmatprep.mubr.f32.mxu0 %v1997
    %2162 = vmatmul.mubr.f32.gmra.mxu0 %v1996
    %v2163 = vpop.f32.mrf.mxu0
    %v2164 = vadd.f32 %v2079, %v2163
    %v2165 = vpop.f32.mrf.mxu0
    %2166 = vmatprep.mubr.f32.mxu0 %v2001
    %2167 = vmatmul.mubr.f32.gmra.mxu0 %v2000
    %v2168 = vpop.f32.mrf.mxu0
    %v2169 = vadd.f32 %v2084, %v2168
    %v2170 = vpop.f32.mrf.mxu0
    %2171 = vdwg.mxu0
    %v2172 = vlaneseq
    %v2173 = vshrl.u32 %v2172, 7
    %v2174 = vsub.s32 1, %v2173
    %v2175 = vrot.slane %v113, %v2174
    %2176 = vmatprep.subr.mxu0 0.0
    %2177 = vmatpush1.msra.mxu0 %v110
    %2178 = vmatprep.subr.mxu0 0.0
    %2179 = vmatpush1.msra.mxu0 %v107
    %2180 = vmatprep.subr.mxu0 0.0
    %2181 = vmatpush1.msra.mxu0 %v104
    %2182 = vmatprep.subr.mxu0 0.0
    %2183 = vmatpush1.msra.mxu0 %v101
    %2184 = vmatprep.subr.mxu0 0.0
    %2185 = vmatpush1.msra.mxu0 %v98
    %2186 = vmatprep.subr.mxu0 0.0
    %2187 = vmatpush1.msra.mxu0 %v95
    %2188 = vmatprep.subr.mxu0 0.0
    %2189 = vmatpush1.msra.mxu0 %v92
    %2190 = vmatprep.subr.mxu0 0.0
    %2191 = vmatpush1.msra.mxu0 %v89
    %2192 = vmatprep.subr.mxu0 0.0
    %2193 = vmatpush1.msra.mxu0 %v86
    %2194 = vmatprep.subr.mxu0 0.0
    %2195 = vmatpush1.msra.mxu0 %v83
    %2196 = vmatprep.subr.mxu0 0.0
    %2197 = vmatpush1.msra.mxu0 %v80
    %2198 = vmatprep.subr.mxu0 0.0
    %2199 = vmatpush1.msra.mxu0 %v77
    %2200 = vmatprep.subr.mxu0 0.0
    %2201 = vmatpush1.msra.mxu0 %v74
    %2202 = vmatprep.subr.mxu0 0.0
    %2203 = vmatpush1.msra.mxu0 %v71
    %2204 = vmatprep.subr.mxu0 0.0
    %2205 = vmatpush1.msra.mxu0 %v68
    %2206 = vmatprep.subr.mxu0 0.0
    %2207 = vmatpush1.msra.mxu0 %v65
    %2208 = vmatprep.subr.mxu0 0.0
    %2209 = vmatpush2.msra.mxu0 0.0
    %2210 = vmatprep.subr.mxu0 0.0
    %2211 = vmatpush2.msra.mxu0 0.0
    %2212 = vmatprep.subr.mxu0 0.0
    %2213 = vmatpush2.msra.mxu0 0.0
    %2214 = vmatprep.subr.mxu0 0.0
    %2215 = vmatpush2.msra.mxu0 0.0
    %2216 = vmatprep.subr.mxu0 0.0
    %2217 = vmatpush2.msra.mxu0 0.0
    %2218 = vmatprep.subr.mxu0 0.0
    %2219 = vmatpush2.msra.mxu0 0.0
    %2220 = vmatprep.subr.mxu0 0.0
    %2221 = vmatpush2.msra.mxu0 0.0
    %2222 = vmatprep.subr.mxu0 0.0
    %2223 = vmatpush2.msra.mxu0 0.0
    %2224 = vmatprep.subr.mxu0 0.0
    %2225 = vmatpush2.msra.mxu0 0.0
    %2226 = vmatprep.subr.mxu0 0.0
    %2227 = vmatpush2.msra.mxu0 0.0
    %2228 = vmatprep.subr.mxu0 0.0
    %2229 = vmatpush2.msra.mxu0 0.0
    %2230 = vmatprep.subr.mxu0 0.0
    %2231 = vmatpush2.msra.mxu0 0.0
    %2232 = vmatprep.subr.mxu0 0.0
    %2233 = vmatpush2.msra.mxu0 0.0
    %2234 = vmatprep.subr.mxu0 0.0
    %2235 = vmatpush2.msra.mxu0 0.0
    %2236 = vmatprep.subr.mxu0 0.0
    %2237 = vmatpush2.msra.mxu0 0.0
    %2238 = vmatprep.subr.mxu0 0.0
    %2239 = vmatpush2.msra.mxu0 0.0
    %2240 = vmatprep.mubr.f32.mxu0 0.0
    %2241 = vmatmul.mubr.f32.gmra.mxu0 %v2154
    %v2242 = vpop.f32.mrf.mxu0
    %v2243 = vadd.f32 %v2175, %v2242
    %v2244 = vpop.f32.mrf.mxu0
    %2245 = vmatprep.mubr.f32.mxu0 0.0
    %2246 = vmatmul.mubr.f32.gmra.mxu0 %v2159
    %v2247 = vpop.f32.mrf.mxu0
    %v2248 = vadd.f32 %v2175, %v2247
    %v2249 = vpop.f32.mrf.mxu0
    %2250 = vmatprep.mubr.f32.mxu0 0.0
    %2251 = vmatmul.mubr.f32.gmra.mxu0 %v2164
    %v2252 = vpop.f32.mrf.mxu0
    %v2253 = vadd.f32 %v2175, %v2252
    %v2254 = vpop.f32.mrf.mxu0
    %2255 = vmatprep.mubr.f32.mxu0 0.0
    %2256 = vmatmul.mubr.f32.gmra.mxu0 %v2169
    %v2257 = vpop.f32.mrf.mxu0
    %v2258 = vadd.f32 %v2175, %v2257
    %v2259 = vpop.f32.mrf.mxu0
    %2260 = vdwg.mxu0
    %v2261 = vadd.f32 %v2243, %v61
    %v2262 = vadd.f32 %v2248, %v62
    %v2263 = vadd.f32 %v2253, %v63
    %v2264 = vadd.f32 %v2258, %v64
    %2265 = vadd.xlane.f32.xlu0 %v2261
    %v2266 = vpop.xlane.xlu0 %2265
    %2267 = vadd.xlane.f32.xlu0 %v2262
    %v2268 = vpop.xlane.xlu0 %2267
    %2269 = vadd.xlane.f32.xlu0 %v2263
    %v2270 = vpop.xlane.xlu0 %2269
    %2271 = vadd.xlane.f32.xlu0 %v2264
    %v2272 = vpop.xlane.xlu0 %2271
    %v2273 = vrcp.pop 128.0
    %v2274 = vmul.f32 %v2266, %v2273
    %v2275 = vmul.f32 %v2268, %v2273
    %v2276 = vmul.f32 %v2270, %v2273
    %v2277 = vmul.f32 %v2272, %v2273
    %v2278 = vsub.f32 %v2261, %v2274
    %v2279 = vsub.f32 %v2262, %v2275
    %v2280 = vsub.f32 %v2263, %v2276
    %v2281 = vsub.f32 %v2264, %v2277
    %v2282 = vmul.f32 %v2278, %v2278
    %v2283 = vmul.f32 %v2279, %v2279
    %v2284 = vmul.f32 %v2280, %v2280
    %v2285 = vmul.f32 %v2281, %v2281
    %2286 = vadd.xlane.f32.xlu0 %v2282
    %v2287 = vpop.xlane.xlu0 %2286
    %2288 = vadd.xlane.f32.xlu0 %v2283
    %v2289 = vpop.xlane.xlu0 %2288
    %2290 = vadd.xlane.f32.xlu0 %v2284
    %v2291 = vpop.xlane.xlu0 %2290
    %2292 = vadd.xlane.f32.xlu0 %v2285
    %v2293 = vpop.xlane.xlu0 %2292
    %v2294 = vmul.f32 %v2287, %v2273
    %v2295 = vmul.f32 %v2289, %v2273
    %v2296 = vmul.f32 %v2291, %v2273
    %v2297 = vmul.f32 %v2293, %v2273
    %v2298 = vadd.f32 %v2294, 1e-06
    %v2299 = vadd.f32 %v2295, 1e-06
    %v2300 = vadd.f32 %v2296, 1e-06
    %v2301 = vadd.f32 %v2297, 1e-06
    %v2302 = vrsqrt.pop %v2298
    %v2303 = vrsqrt.pop %v2299
    %v2304 = vrsqrt.pop %v2300
    %v2305 = vrsqrt.pop %v2301
    %v2306 = vmul.f32 %v2278, %v2302
    %v2307 = vmul.f32 %v2279, %v2303
    %v2308 = vmul.f32 %v2280, %v2304
    %v2309 = vmul.f32 %v2281, %v2305
    %v2310 = vlaneseq
    %v2311 = vshrl.u32 %v2310, 7
    %v2312 = vsub.s32 4, %v2311
    %v2313 = vrot.slane %v113, %v2312
    %v2314 = vmul.f32 %v2306, %v2313
    %v2315 = vmul.f32 %v2307, %v2313
    %v2316 = vmul.f32 %v2308, %v2313
    %v2317 = vmul.f32 %v2309, %v2313
    %v2318 = vlaneseq
    %v2319 = vshrl.u32 %v2318, 7
    %v2320 = vsub.s32 5, %v2319
    %v2321 = vrot.slane %v113, %v2320
    %v2322 = vadd.f32 %v2314, %v2321
    %v2323 = vadd.f32 %v2315, %v2321
    %v2324 = vadd.f32 %v2316, %v2321
    %v2325 = vadd.f32 %v2317, %v2321
    %v2326 = vlaneseq
    %v2327 = vshrl.u32 %v2326, 7
    %v2328 = vsub.s32 2, %v2327
    %v2329 = vrot.slane %v113, %v2328
    %2330 = vmatprep.subr.mxu0 0.0
    %2331 = vmatpush1.msra.mxu0 %v111
    %2332 = vmatprep.subr.mxu0 0.0
    %2333 = vmatpush1.msra.mxu0 %v108
    %2334 = vmatprep.subr.mxu0 0.0
    %2335 = vmatpush1.msra.mxu0 %v105
    %2336 = vmatprep.subr.mxu0 0.0
    %2337 = vmatpush1.msra.mxu0 %v102
    %2338 = vmatprep.subr.mxu0 0.0
    %2339 = vmatpush1.msra.mxu0 %v99
    %2340 = vmatprep.subr.mxu0 0.0
    %2341 = vmatpush1.msra.mxu0 %v96
    %2342 = vmatprep.subr.mxu0 0.0
    %2343 = vmatpush1.msra.mxu0 %v93
    %2344 = vmatprep.subr.mxu0 0.0
    %2345 = vmatpush1.msra.mxu0 %v90
    %2346 = vmatprep.subr.mxu0 0.0
    %2347 = vmatpush1.msra.mxu0 %v87
    %2348 = vmatprep.subr.mxu0 0.0
    %2349 = vmatpush1.msra.mxu0 %v84
    %2350 = vmatprep.subr.mxu0 0.0
    %2351 = vmatpush1.msra.mxu0 %v81
    %2352 = vmatprep.subr.mxu0 0.0
    %2353 = vmatpush1.msra.mxu0 %v78
    %2354 = vmatprep.subr.mxu0 0.0
    %2355 = vmatpush1.msra.mxu0 %v75
    %2356 = vmatprep.subr.mxu0 0.0
    %2357 = vmatpush1.msra.mxu0 %v72
    %2358 = vmatprep.subr.mxu0 0.0
    %2359 = vmatpush1.msra.mxu0 %v69
    %2360 = vmatprep.subr.mxu0 0.0
    %2361 = vmatpush1.msra.mxu0 %v66
    %2362 = vmatprep.subr.mxu0 0.0
    %2363 = vmatpush2.msra.mxu0 0.0
    %2364 = vmatprep.subr.mxu0 0.0
    %2365 = vmatpush2.msra.mxu0 0.0
    %2366 = vmatprep.subr.mxu0 0.0
    %2367 = vmatpush2.msra.mxu0 0.0
    %2368 = vmatprep.subr.mxu0 0.0
    %2369 = vmatpush2.msra.mxu0 0.0
    %2370 = vmatprep.subr.mxu0 0.0
    %2371 = vmatpush2.msra.mxu0 0.0
    %2372 = vmatprep.subr.mxu0 0.0
    %2373 = vmatpush2.msra.mxu0 0.0
    %2374 = vmatprep.subr.mxu0 0.0
    %2375 = vmatpush2.msra.mxu0 0.0
    %2376 = vmatprep.subr.mxu0 0.0
    %2377 = vmatpush2.msra.mxu0 0.0
    %2378 = vmatprep.subr.mxu0 0.0
    %2379 = vmatpush2.msra.mxu0 0.0
    %2380 = vmatprep.subr.mxu0 0.0
    %2381 = vmatpush2.msra.mxu0 0.0
    %2382 = vmatprep.subr.mxu0 0.0
    %2383 = vmatpush2.msra.mxu0 0.0
    %2384 = vmatprep.subr.mxu0 0.0
    %2385 = vmatpush2.msra.mxu0 0.0
    %2386 = vmatprep.subr.mxu0 0.0
    %2387 = vmatpush2.msra.mxu0 0.0
    %2388 = vmatprep.subr.mxu0 0.0
    %2389 = vmatpush2.msra.mxu0 0.0
    %2390 = vmatprep.subr.mxu0 0.0
    %2391 = vmatpush2.msra.mxu0 0.0
    %2392 = vmatprep.subr.mxu0 0.0
    %2393 = vmatpush2.msra.mxu0 0.0
    %2394 = vmatprep.mubr.f32.mxu0 0.0
    %2395 = vmatmul.mubr.f32.gmra.mxu0 %v2322
    %v2396 = vpop.f32.mrf.mxu0
    %v2397 = vadd.f32 %v2329, %v2396
    %v2398 = vpop.f32.mrf.mxu0
    %2399 = vmatprep.mubr.f32.mxu0 0.0
    %2400 = vmatmul.mubr.f32.gmra.mxu0 %v2323
    %v2401 = vpop.f32.mrf.mxu0
    %v2402 = vadd.f32 %v2329, %v2401
    %v2403 = vpop.f32.mrf.mxu0
    %2404 = vmatprep.mubr.f32.mxu0 0.0
    %2405 = vmatmul.mubr.f32.gmra.mxu0 %v2324
    %v2406 = vpop.f32.mrf.mxu0
    %v2407 = vadd.f32 %v2329, %v2406
    %v2408 = vpop.f32.mrf.mxu0
    %2409 = vmatprep.mubr.f32.mxu0 0.0
    %2410 = vmatmul.mubr.f32.gmra.mxu0 %v2325
    %v2411 = vpop.f32.mrf.mxu0
    %v2412 = vadd.f32 %v2329, %v2411
    %v2413 = vpop.f32.mrf.mxu0
    %2414 = vdwg.mxu0
    %v2415 = vmax.f32 %v2397, 0.0
    %v2416 = vmax.f32 %v2402, 0.0
    %v2417 = vmax.f32 %v2407, 0.0
    %v2418 = vmax.f32 %v2412, 0.0
    %v2419 = vlaneseq
    %v2420 = vshrl.u32 %v2419, 7
    %v2421 = vsub.s32 3, %v2420
    %v2422 = vrot.slane %v113, %v2421
    %2423 = vmatprep.subr.mxu0 0.0
    %2424 = vmatpush1.msra.mxu0 %v112
    %2425 = vmatprep.subr.mxu0 0.0
    %2426 = vmatpush1.msra.mxu0 %v109
    %2427 = vmatprep.subr.mxu0 0.0
    %2428 = vmatpush1.msra.mxu0 %v106
    %2429 = vmatprep.subr.mxu0 0.0
    %2430 = vmatpush1.msra.mxu0 %v103
    %2431 = vmatprep.subr.mxu0 0.0
    %2432 = vmatpush1.msra.mxu0 %v100
    %2433 = vmatprep.subr.mxu0 0.0
    %2434 = vmatpush1.msra.mxu0 %v97
    %2435 = vmatprep.subr.mxu0 0.0
    %2436 = vmatpush1.msra.mxu0 %v94
    %2437 = vmatprep.subr.mxu0 0.0
    %2438 = vmatpush1.msra.mxu0 %v91
    %2439 = vmatprep.subr.mxu0 0.0
    %2440 = vmatpush1.msra.mxu0 %v88
    %2441 = vmatprep.subr.mxu0 0.0
    %2442 = vmatpush1.msra.mxu0 %v85
    %2443 = vmatprep.subr.mxu0 0.0
    %2444 = vmatpush1.msra.mxu0 %v82
    %2445 = vmatprep.subr.mxu0 0.0
    %2446 = vmatpush1.msra.mxu0 %v79
    %2447 = vmatprep.subr.mxu0 0.0
    %2448 = vmatpush1.msra.mxu0 %v76
    %2449 = vmatprep.subr.mxu0 0.0
    %2450 = vmatpush1.msra.mxu0 %v73
    %2451 = vmatprep.subr.mxu0 0.0
    %2452 = vmatpush1.msra.mxu0 %v70
    %2453 = vmatprep.subr.mxu0 0.0
    %2454 = vmatpush1.msra.mxu0 %v67
    %2455 = vmatprep.subr.mxu0 0.0
    %2456 = vmatpush2.msra.mxu0 0.0
    %2457 = vmatprep.subr.mxu0 0.0
    %2458 = vmatpush2.msra.mxu0 0.0
    %2459 = vmatprep.subr.mxu0 0.0
    %2460 = vmatpush2.msra.mxu0 0.0
    %2461 = vmatprep.subr.mxu0 0.0
    %2462 = vmatpush2.msra.mxu0 0.0
    %2463 = vmatprep.subr.mxu0 0.0
    %2464 = vmatpush2.msra.mxu0 0.0
    %2465 = vmatprep.subr.mxu0 0.0
    %2466 = vmatpush2.msra.mxu0 0.0
    %2467 = vmatprep.subr.mxu0 0.0
    %2468 = vmatpush2.msra.mxu0 0.0
    %2469 = vmatprep.subr.mxu0 0.0
    %2470 = vmatpush2.msra.mxu0 0.0
    %2471 = vmatprep.subr.mxu0 0.0
    %2472 = vmatpush2.msra.mxu0 0.0
    %2473 = vmatprep.subr.mxu0 0.0
    %2474 = vmatpush2.msra.mxu0 0.0
    %2475 = vmatprep.subr.mxu0 0.0
    %2476 = vmatpush2.msra.mxu0 0.0
    %2477 = vmatprep.subr.mxu0 0.0
    %2478 = vmatpush2.msra.mxu0 0.0
    %2479 = vmatprep.subr.mxu0 0.0
    %2480 = vmatpush2.msra.mxu0 0.0
    %2481 = vmatprep.subr.mxu0 0.0
    %2482 = vmatpush2.msra.mxu0 0.0
    %2483 = vmatprep.subr.mxu0 0.0
    %2484 = vmatpush2.msra.mxu0 0.0
    %2485 = vmatprep.subr.mxu0 0.0
    %2486 = vmatpush2.msra.mxu0 0.0
    %2487 = vmatprep.mubr.f32.mxu0 0.0
    %2488 = vmatmul.mubr.f32.gmra.mxu0 %v2415
    %v2489 = vpop.f32.mrf.mxu0
    %v2490 = vadd.f32 %v2422, %v2489
    %v2491 = vpop.f32.mrf.mxu0
    %2492 = vmatprep.mubr.f32.mxu0 0.0
    %2493 = vmatmul.mubr.f32.gmra.mxu0 %v2416
    %v2494 = vpop.f32.mrf.mxu0
    %v2495 = vadd.f32 %v2422, %v2494
    %v2496 = vpop.f32.mrf.mxu0
    %2497 = vmatprep.mubr.f32.mxu0 0.0
    %2498 = vmatmul.mubr.f32.gmra.mxu0 %v2417
    %v2499 = vpop.f32.mrf.mxu0
    %v2500 = vadd.f32 %v2422, %v2499
    %v2501 = vpop.f32.mrf.mxu0
    %2502 = vmatprep.mubr.f32.mxu0 0.0
    %2503 = vmatmul.mubr.f32.gmra.mxu0 %v2418
    %v2504 = vpop.f32.mrf.mxu0
    %v2505 = vadd.f32 %v2422, %v2504
    %v2506 = vpop.f32.mrf.mxu0
    %2507 = vdwg.mxu0
    %v2508 = vadd.f32 %v2322, %v2490
    %v2509 = vadd.f32 %v2323, %v2495
    %v2510 = vadd.f32 %v2324, %v2500
    %v2511 = vadd.f32 %v2325, %v2505
    %2512 = vadd.xlane.f32.xlu0 %v2508
    %v2513 = vpop.xlane.xlu0 %2512
    %2514 = vadd.xlane.f32.xlu0 %v2509
    %v2515 = vpop.xlane.xlu0 %2514
    %2516 = vadd.xlane.f32.xlu0 %v2510
    %v2517 = vpop.xlane.xlu0 %2516
    %2518 = vadd.xlane.f32.xlu0 %v2511
    %v2519 = vpop.xlane.xlu0 %2518
    %v2520 = vmul.f32 %v2513, %v2273
    %v2521 = vmul.f32 %v2515, %v2273
    %v2522 = vmul.f32 %v2517, %v2273
    %v2523 = vmul.f32 %v2519, %v2273
    %v2524 = vsub.f32 %v2508, %v2520
    %v2525 = vsub.f32 %v2509, %v2521
    %v2526 = vsub.f32 %v2510, %v2522
    %v2527 = vsub.f32 %v2511, %v2523
    %v2528 = vmul.f32 %v2524, %v2524
    %v2529 = vmul.f32 %v2525, %v2525
    %v2530 = vmul.f32 %v2526, %v2526
    %v2531 = vmul.f32 %v2527, %v2527
    %2532 = vadd.xlane.f32.xlu0 %v2528
    %v2533 = vpop.xlane.xlu0 %2532
    %2534 = vadd.xlane.f32.xlu0 %v2529
    %v2535 = vpop.xlane.xlu0 %2534
    %2536 = vadd.xlane.f32.xlu0 %v2530
    %v2537 = vpop.xlane.xlu0 %2536
    %2538 = vadd.xlane.f32.xlu0 %v2531
    %v2539 = vpop.xlane.xlu0 %2538
    %v2540 = vmul.f32 %v2533, %v2273
    %v2541 = vmul.f32 %v2535, %v2273
    %v2542 = vmul.f32 %v2537, %v2273
    %v2543 = vmul.f32 %v2539, %v2273
    %v2544 = vadd.f32 %v2540, 1e-06
    %v2545 = vadd.f32 %v2541, 1e-06
    %v2546 = vadd.f32 %v2542, 1e-06
    %v2547 = vadd.f32 %v2543, 1e-06
    %v2548 = vrsqrt.pop %v2544
    %v2549 = vrsqrt.pop %v2545
    %v2550 = vrsqrt.pop %v2546
    %v2551 = vrsqrt.pop %v2547
    %v2552 = vmul.f32 %v2524, %v2548
    %v2553 = vmul.f32 %v2525, %v2549
    %v2554 = vmul.f32 %v2526, %v2550
    %v2555 = vmul.f32 %v2527, %v2551
    %v2556 = vlaneseq
    %v2557 = vshrl.u32 %v2556, 7
    %v2558 = vsub.s32 6, %v2557
    %v2559 = vrot.slane %v113, %v2558
    %v2560 = vmul.f32 %v2552, %v2559
    %v2561 = vmul.f32 %v2553, %v2559
    %v2562 = vmul.f32 %v2554, %v2559
    %v2563 = vmul.f32 %v2555, %v2559
    %v2564 = vlaneseq
    %v2565 = vshrl.u32 %v2564, 7
    %v2566 = vsub.s32 7, %v2565
    %v2567 = vrot.slane %v113, %v2566
    %v2568 = vadd.f32 %v2560, %v2567
    %v2569 = vadd.f32 %v2561, %v2567
    %v2570 = vadd.f32 %v2562, %v2567
    %v2571 = vadd.f32 %v2563, %v2567
    %2572 = vst [vmem:[#allocation7] sm:$0xff] %v2568
    %2573 = vst [vmem:[#allocation7 + $0x8] sm:$0xff] %v2569
    %2574 = vst [vmem:[#allocation7 + $0x10] sm:$0xff] %v2570
    %2575 = vst [vmem:[#allocation7 + $0x18] sm:$0xff] %v2571
    // Predicated region
    $region46: #{encoder_layer.1} parent=1 // pred_check
      _
    $region47: #{encoder_layer.1} parent=1 // pred_check_branch
      %2577 = sbr.rel (0) target = $region49
    $region48: #{encoder_layer.1} parent=1 // pred_region
      %s2579 = ssub.s32 512, 512
      %2580 = vsyncadd [#allocation4], %s2579
      %s2581 = sshll.u32 [#allocation7], 4
      %s2582 = int_to_ptr.vmem [resolvable:$true] %s2581
      %2587 = dma.vmem_to_hbm [thread:$0]  %s2582, 512, %s9, [#allocation4], 128, 128, 8
    $region49: #{encoder_layer.1} parent=1 // pred_fallthru
      _
    // Predicated region
    $region50: #{encoder_layer.1} parent=1 // pred_check
      _
    $region51: #{encoder_layer.1} parent=1 // pred_check_branch
      %2589 = sbr.rel (0) target = $region53
    $region52: #{encoder_layer.1} parent=1 // pred_region
      %2590 = dma.done [#allocation4], 512
    $region53: #{encoder_layer.1} parent=1 // pred_fallthru
      _
    %2591 = vsyncpa [#allocation3], 1
    %2592 = vsyncpa [#allocation6], 1
    %2593 = vsyncpa [#allocation4], 1

</llo_original>
